<compile_context>
chip_gen: v7x
topology: tpu7x:2x2x1
jax: 0.10.0
libtpu: 0.0.40
codegen_flags: <defaults>
</compile_context>

<pallas_src>
import functools

import jax
import jax.numpy as jnp
from jax import lax
from jax.experimental import pallas as pl
from jax.experimental.pallas import tpu as pltpu

# ---------------------------------------------------------------------------
# Model / problem sizes (small, consistent with the module's forward)
# ---------------------------------------------------------------------------
FEAT_DIM = 512          # nn.Linear(512, embed_size) input dim (fixed by the module)
VOCAB = 64
EMBED = 32
HIDDEN = 32
BATCH = 2
SEQ = 8                 # caption length; forward produces SEQ + 1 timesteps
VPAD = 128              # lane-dense padded vocab dim for the output store


# ---------------------------------------------------------------------------
# Pallas kernel: in-kernel token gather + LSTM recurrence (only h @ W_hh on the
# critical path) + single batched vocab projection / lane-dense store.
# ---------------------------------------------------------------------------
def caption_kernel(cap_ref,       # SMEM (B*T,) int32   token ids (row-major [b, t])
                   feat_pre_ref,  # VMEM (B, 4H)        feature-row gate pre-acts (+bias)
                   tok_pre_ref,   # VMEM (V, 1, 4H)     per-token gate pre-acts (+bias)
                   whh_ref,       # VMEM (H, 4H)        recurrent weight, transposed
                   wfc_ref,       # VMEM (H, VPAD)      fc weight, transposed + lane-padded
                   bfc_ref,       # VMEM (1, VPAD)      fc bias, lane-padded
                   out_ref,       # VMEM ((T+1)*B, VPAD) flattened logits
                   *, seq_steps, seq_len, batch, hidden):
    f32 = jnp.float32
    H = hidden
    w_hh = whh_ref[...]                                   # loop-invariant MXU RHS

    # Single-tanh gate nonlinearity: sigmoid(x) = 0.5*tanh(0.5*x) + 0.5 on the
    # i/f/o lane blocks, plain tanh on the g block.  Constants hoisted (one-time VPU).
    lane = lax.broadcasted_iota(jnp.int32, (1, 4 * H), 1)
    is_g = (lane >= 2 * H) & (lane < 3 * H)
    scale = jnp.where(is_g, 1.0, 0.5).astype(f32)         # (1, 4H)
    shift = jnp.where(is_g, 0.0, 0.5).astype(f32)         # (1, 4H)

    # Gather all per-step input pre-activations up front (off the serial h-chain).
    x_pre = [feat_pre_ref[...]]                           # step 0: projected features
    for t in range(1, seq_steps):
        rows = [tok_pre_ref[cap_ref[b * seq_len + (t - 1)]]   # (1, 4H) dynamic row
                for b in range(batch)]
        x_pre.append(jnp.concatenate(rows, axis=0))       # (B, 4H)

    h = jnp.zeros((batch, H), f32)
    c = jnp.zeros((batch, H), f32)
    hs = []
    for t in range(seq_steps):                            # fully unrolled recurrence
        gates = x_pre[t] + jnp.dot(h, w_hh, preferred_element_type=f32)   # (B, 4H)
        act = scale * jnp.tanh(scale * gates) + shift     # one EUP tanh per step
        i_g = act[:, 0 * H:1 * H]
        f_g = act[:, 1 * H:2 * H]
        g_g = act[:, 2 * H:3 * H]
        o_g = act[:, 3 * H:4 * H]
        c = f_g * c + i_g * g_g
        h = o_g * jnp.tanh(c)
        hs.append(h)                                      # kept in vregs (no scratch)

    # Single batched vocab projection + one lane-dense (128-wide) store.
    hs_all = jnp.concatenate(hs, axis=0)                  # ((T+1)*B, H)
    out_ref[...] = (jnp.dot(hs_all, wfc_ref[...], preferred_element_type=f32)
                    + bfc_ref[...])


# ---------------------------------------------------------------------------
# Parameter-only precompute (hoisted out of the per-call path; run once).
# ---------------------------------------------------------------------------
def prepare_params(params):
    f32 = jnp.float32
    hi = lax.Precision.HIGHEST
    w_ih_t = params["w_ih"].T.astype(f32)                         # (E, 4H)
    bias = (params["b_ih"] + params["b_hh"]).astype(f32)          # (4H,)

    # Per-token gate pre-activation table, biases folded: embed @ W_ih^T + b.
    tok_pre = jnp.dot(params["embed"].astype(f32), w_ih_t, precision=hi) + bias[None, :]
    # Feature projection fused with W_ih (only the (B,512)@(512,4H) matmul stays per-call).
    w_feat = jnp.dot(params["wp"].T.astype(f32), w_ih_t, precision=hi)       # (512, 4H)
    b_feat = jnp.dot(params["bp"].astype(f32), w_ih_t, precision=hi) + bias  # (4H,)

    # Lane-dense fc weight / bias (pad vocab 64 -> 128).
    w_fc_pad = jnp.zeros((HIDDEN, VPAD), f32).at[:, :VOCAB].set(params["w_fc"].T.astype(f32))
    b_fc_pad = jnp.zeros((1, VPAD), f32).at[:, :VOCAB].set(params["b_fc"].astype(f32))

    return {
        # (V, 1, 4H): leading-dim layout so in-kernel row gather is a plain dynamic index.
        "tok_pre": tok_pre.reshape(VOCAB, 1, 4 * HIDDEN),
        "w_feat": w_feat,
        "b_feat": b_feat,
        "whh_t": params["w_hh"].T.astype(f32),                    # (H, 4H)
        "w_fc_pad": w_fc_pad,                                     # (H, VPAD)
        "b_fc_pad": b_fc_pad,                                     # (1, VPAD)
    }


# ---------------------------------------------------------------------------
# Per-call forward: one feature matmul + one pallas_call.
# ---------------------------------------------------------------------------
@jax.jit
def caption_model_forward(features, captions, prepared):
    f32 = jnp.float32
    hi = lax.Precision.HIGHEST
    B = features.shape[0]
    T = captions.shape[1]
    H, V = HIDDEN, VOCAB

    feat_pre = (jnp.dot(features.astype(f32), prepared["w_feat"], precision=hi)
                + prepared["b_feat"][None, :])                    # (B, 4H)
    cap_flat = captions.reshape(-1).astype(jnp.int32)             # (B*T,)

    vmem = pl.BlockSpec(memory_space=pltpu.MemorySpace.VMEM)
    smem = pl.BlockSpec(memory_space=pltpu.MemorySpace.SMEM)
    kernel = functools.partial(caption_kernel, seq_steps=T + 1, seq_len=T,
                               batch=B, hidden=H)

    # Advisory cost estimate (recurrence matmuls + batched fc + one EUP tanh/step).
    flops = 2 * (T + 1) * B * H * 4 * H + 2 * (T + 1) * B * H * VPAD
    transcendentals = (T + 1) * B * (4 * H + H)
    bytes_accessed = 4 * (B * 4 * H + VOCAB * 4 * H + H * 4 * H + H * VPAD + VPAD
                          + (T + 1) * B * VPAD) + 4 * B * T

    out_flat = pl.pallas_call(
        kernel,
        out_shape=jax.ShapeDtypeStruct(((T + 1) * B, VPAD), f32),
        in_specs=[smem, vmem, vmem, vmem, vmem, vmem],
        out_specs=vmem,
        cost_estimate=pl.CostEstimate(flops=flops,
                                      transcendentals=transcendentals,
                                      bytes_accessed=bytes_accessed),
    )(
        cap_flat,                 # SMEM token ids
        feat_pre,                 # (B, 4H)
        prepared["tok_pre"],      # (V, 1, 4H)
        prepared["whh_t"],        # (H, 4H)
        prepared["w_fc_pad"],     # (H, VPAD)
        prepared["b_fc_pad"],     # (1, VPAD)
    )

    # Un-pad vocab, restore PyTorch batch-first convention.
    out = out_flat.reshape(T + 1, B, VPAD)[:, :, :V]
    return jnp.transpose(out, (1, 0, 2))                          # (B, T+1, V)


# ---------------------------------------------------------------------------
# Pure-JAX reference (mirrors the PyTorch forward exactly)
# ---------------------------------------------------------------------------
def reference_forward(features, captions, params):
    hi = lax.Precision.HIGHEST
    proj = jnp.dot(features, params["wp"].T, precision=hi) + params["bp"]   # (B, E)
    emb = jnp.take(params["embed"], captions, axis=0)                       # (B, T, E)
    x = jnp.concatenate([proj[:, None, :], emb], axis=1)                    # (B, T+1, E)
    B, Tp1, _ = x.shape
    H = HIDDEN
    h = jnp.zeros((B, H), jnp.float32)
    c = jnp.zeros((B, H), jnp.float32)
    outs = []
    for t in range(Tp1):
        gates = (jnp.dot(x[:, t], params["w_ih"].T, precision=hi) + params["b_ih"]
                 + jnp.dot(h, params["w_hh"].T, precision=hi) + params["b_hh"])
        i_g = jax.nn.sigmoid(gates[:, 0 * H:1 * H])
        f_g = jax.nn.sigmoid(gates[:, 1 * H:2 * H])
        g_g = jnp.tanh(gates[:, 2 * H:3 * H])
        o_g = jax.nn.sigmoid(gates[:, 3 * H:4 * H])
        c = f_g * c + i_g * g_g
        h = o_g * jnp.tanh(c)
        outs.append(jnp.dot(h, params["w_fc"].T, precision=hi) + params["b_fc"])
    return jnp.stack(outs, axis=1)                                          # (B, T+1, V)


# ---------------------------------------------------------------------------
# Deterministic parameter init + driver
# ---------------------------------------------------------------------------
def init_params(key):
    ks = jax.random.split(key, 8)
    s = 0.1
    return {
        "embed": s * jax.random.normal(ks[0], (VOCAB, EMBED), jnp.float32),
        "wp":    s * jax.random.normal(ks[1], (EMBED, FEAT_DIM), jnp.float32),
        "bp":    s * jax.random.normal(ks[2], (EMBED,), jnp.float32),
        "w_ih":  s * jax.random.normal(ks[3], (4 * HIDDEN, EMBED), jnp.float32),
        "w_hh":  s * jax.random.normal(ks[4], (4 * HIDDEN, HIDDEN), jnp.float32),
        "b_ih":  s * jax.random.normal(ks[5], (4 * HIDDEN,), jnp.float32),
        "b_hh":  s * jax.random.normal(ks[6], (4 * HIDDEN,), jnp.float32),
        "w_fc":  s * jax.random.normal(ks[7], (VOCAB, HIDDEN), jnp.float32),
        "b_fc":  jnp.zeros((VOCAB,), jnp.float32),
    }


if __name__ == "__main__":
    key = jax.random.PRNGKey(0)
    k_params, k_feat, k_cap = jax.random.split(key, 3)

    params = init_params(k_params)
    features = jax.random.normal(k_feat, (BATCH, FEAT_DIM), jnp.float32)
    captions = jax.random.randint(k_cap, (BATCH, SEQ), 0, VOCAB, jnp.int32)

    prepared = prepare_params(params)               # param-only precompute, done once
    out = caption_model_forward(features, captions, prepared)
    out = jax.block_until_ready(out)

    ref = reference_forward(features, captions, params)
    assert out.shape == (BATCH, SEQ + 1, VOCAB), out.shape
    # Tolerance slightly above 1e-4 to absorb f32-MXU-pass / sigmoid-via-tanh ULP drift
    # compounded over the 9-step recurrence (still far below any algorithmic error).
    assert jnp.allclose(out, ref, atol=5e-4, rtol=5e-4), \
        float(jnp.max(jnp.abs(out - ref)))

    print("KERNEL_OK")
</pallas_src>

<mosaic_0001>
module attributes {stable_mosaic.version = 11 : i64} {
  func.func @caption_kernel(%arg0: memref<16xi32, #tpu.memory_space<smem>>, %arg1: memref<2x128xf32, #tpu.memory_space<vmem>>, %arg2: memref<64x1x128xf32, #tpu.memory_space<vmem>>, %arg3: memref<32x128xf32, #tpu.memory_space<vmem>>, %arg4: memref<32x128xf32, #tpu.memory_space<vmem>>, %arg5: memref<1x128xf32, #tpu.memory_space<vmem>>, %arg6: memref<18x128xf32, #tpu.memory_space<vmem>>) attributes {dimension_semantics = [], scalar_prefetch = 0 : i64, scratch_operands = 0 : i64, tpu.core_type = #tpu.core_type<tc>} {
    %c0 = arith.constant 0 : index
    %c0_0 = arith.constant 0 : index
    %0 = vector.load %arg3[%c0, %c0_0] : memref<32x128xf32, #tpu.memory_space<vmem>>, vector<32x128xf32>
    %1 = tpu.iota {dimensions = array<i32: 1>} : vector<1x128xi32>
    %c64_i32 = arith.constant 64 : i32
    %2 = vector.broadcast %c64_i32 : i32 to vector<1x128xi32>
    %3 = arith.cmpi sge, %1, %2 : vector<1x128xi32>
    %c96_i32 = arith.constant 96 : i32
    %4 = vector.broadcast %c96_i32 : i32 to vector<1x128xi32>
    %5 = arith.cmpi slt, %1, %4 : vector<1x128xi32>
    %6 = arith.andi %3, %5 : vector<1x128xi1>
    %cst = arith.constant 1.000000e+00 : f32
    %cst_1 = arith.constant 5.000000e-01 : f32
    %7 = vector.broadcast %cst : f32 to vector<1x128xf32>
    %8 = vector.broadcast %cst_1 : f32 to vector<1x128xf32>
    %9 = arith.select %6, %7, %8 : vector<1x128xi1>, vector<1x128xf32>
    %cst_2 = arith.constant 0.000000e+00 : f32
    %cst_3 = arith.constant 5.000000e-01 : f32
    %10 = vector.broadcast %cst_2 : f32 to vector<1x128xf32>
    %11 = vector.broadcast %cst_3 : f32 to vector<1x128xf32>
    %12 = arith.select %6, %10, %11 : vector<1x128xi1>, vector<1x128xf32>
    %c0_4 = arith.constant 0 : index
    %c0_5 = arith.constant 0 : index
    %13 = vector.load %arg1[%c0_4, %c0_5] : memref<2x128xf32, #tpu.memory_space<vmem>>, vector<2x128xf32>
    %c0_6 = arith.constant 0 : index
    %14 = memref.load %arg0[%c0_6] : memref<16xi32, #tpu.memory_space<smem>>
    %15 = arith.index_cast %14 : i32 to index
    %c0_7 = arith.constant 0 : index
    %c0_8 = arith.constant 0 : index
    %16 = vector.load %arg2[%15, %c0_7, %c0_8] : memref<64x1x128xf32, #tpu.memory_space<vmem>>, vector<1x1x128xf32>
    %17 = vector.shape_cast %16 : vector<1x1x128xf32> to vector<1x128xf32>
    %c8 = arith.constant 8 : index
    %18 = memref.load %arg0[%c8] : memref<16xi32, #tpu.memory_space<smem>>
    %19 = arith.index_cast %18 : i32 to index
    %c0_9 = arith.constant 0 : index
    %c0_10 = arith.constant 0 : index
    %20 = vector.load %arg2[%19, %c0_9, %c0_10] : memref<64x1x128xf32, #tpu.memory_space<vmem>>, vector<1x1x128xf32>
    %21 = vector.shape_cast %20 : vector<1x1x128xf32> to vector<1x128xf32>
    %22 = tpu.concatenate %17, %21 in 0 : vector<1x128xf32>, vector<1x128xf32> -> vector<2x128xf32>
    %c1 = arith.constant 1 : index
    %23 = memref.load %arg0[%c1] : memref<16xi32, #tpu.memory_space<smem>>
    %24 = arith.index_cast %23 : i32 to index
    %c0_11 = arith.constant 0 : index
    %c0_12 = arith.constant 0 : index
    %25 = vector.load %arg2[%24, %c0_11, %c0_12] : memref<64x1x128xf32, #tpu.memory_space<vmem>>, vector<1x1x128xf32>
    %26 = vector.shape_cast %25 : vector<1x1x128xf32> to vector<1x128xf32>
    %c9 = arith.constant 9 : index
    %27 = memref.load %arg0[%c9] : memref<16xi32, #tpu.memory_space<smem>>
    %28 = arith.index_cast %27 : i32 to index
    %c0_13 = arith.constant 0 : index
    %c0_14 = arith.constant 0 : index
    %29 = vector.load %arg2[%28, %c0_13, %c0_14] : memref<64x1x128xf32, #tpu.memory_space<vmem>>, vector<1x1x128xf32>
    %30 = vector.shape_cast %29 : vector<1x1x128xf32> to vector<1x128xf32>
    %31 = tpu.concatenate %26, %30 in 0 : vector<1x128xf32>, vector<1x128xf32> -> vector<2x128xf32>
    %c2 = arith.constant 2 : index
    %32 = memref.load %arg0[%c2] : memref<16xi32, #tpu.memory_space<smem>>
    %33 = arith.index_cast %32 : i32 to index
    %c0_15 = arith.constant 0 : index
    %c0_16 = arith.constant 0 : index
    %34 = vector.load %arg2[%33, %c0_15, %c0_16] : memref<64x1x128xf32, #tpu.memory_space<vmem>>, vector<1x1x128xf32>
    %35 = vector.shape_cast %34 : vector<1x1x128xf32> to vector<1x128xf32>
    %c10 = arith.constant 10 : index
    %36 = memref.load %arg0[%c10] : memref<16xi32, #tpu.memory_space<smem>>
    %37 = arith.index_cast %36 : i32 to index
    %c0_17 = arith.constant 0 : index
    %c0_18 = arith.constant 0 : index
    %38 = vector.load %arg2[%37, %c0_17, %c0_18] : memref<64x1x128xf32, #tpu.memory_space<vmem>>, vector<1x1x128xf32>
    %39 = vector.shape_cast %38 : vector<1x1x128xf32> to vector<1x128xf32>
    %40 = tpu.concatenate %35, %39 in 0 : vector<1x128xf32>, vector<1x128xf32> -> vector<2x128xf32>
    %c3 = arith.constant 3 : index
    %41 = memref.load %arg0[%c3] : memref<16xi32, #tpu.memory_space<smem>>
    %42 = arith.index_cast %41 : i32 to index
    %c0_19 = arith.constant 0 : index
    %c0_20 = arith.constant 0 : index
    %43 = vector.load %arg2[%42, %c0_19, %c0_20] : memref<64x1x128xf32, #tpu.memory_space<vmem>>, vector<1x1x128xf32>
    %44 = vector.shape_cast %43 : vector<1x1x128xf32> to vector<1x128xf32>
    %c11 = arith.constant 11 : index
    %45 = memref.load %arg0[%c11] : memref<16xi32, #tpu.memory_space<smem>>
    %46 = arith.index_cast %45 : i32 to index
    %c0_21 = arith.constant 0 : index
    %c0_22 = arith.constant 0 : index
    %47 = vector.load %arg2[%46, %c0_21, %c0_22] : memref<64x1x128xf32, #tpu.memory_space<vmem>>, vector<1x1x128xf32>
    %48 = vector.shape_cast %47 : vector<1x1x128xf32> to vector<1x128xf32>
    %49 = tpu.concatenate %44, %48 in 0 : vector<1x128xf32>, vector<1x128xf32> -> vector<2x128xf32>
    %c4 = arith.constant 4 : index
    %50 = memref.load %arg0[%c4] : memref<16xi32, #tpu.memory_space<smem>>
    %51 = arith.index_cast %50 : i32 to index
    %c0_23 = arith.constant 0 : index
    %c0_24 = arith.constant 0 : index
    %52 = vector.load %arg2[%51, %c0_23, %c0_24] : memref<64x1x128xf32, #tpu.memory_space<vmem>>, vector<1x1x128xf32>
    %53 = vector.shape_cast %52 : vector<1x1x128xf32> to vector<1x128xf32>
    %c12 = arith.constant 12 : index
    %54 = memref.load %arg0[%c12] : memref<16xi32, #tpu.memory_space<smem>>
    %55 = arith.index_cast %54 : i32 to index
    %c0_25 = arith.constant 0 : index
    %c0_26 = arith.constant 0 : index
    %56 = vector.load %arg2[%55, %c0_25, %c0_26] : memref<64x1x128xf32, #tpu.memory_space<vmem>>, vector<1x1x128xf32>
    %57 = vector.shape_cast %56 : vector<1x1x128xf32> to vector<1x128xf32>
    %58 = tpu.concatenate %53, %57 in 0 : vector<1x128xf32>, vector<1x128xf32> -> vector<2x128xf32>
    %c5 = arith.constant 5 : index
    %59 = memref.load %arg0[%c5] : memref<16xi32, #tpu.memory_space<smem>>
    %60 = arith.index_cast %59 : i32 to index
    %c0_27 = arith.constant 0 : index
    %c0_28 = arith.constant 0 : index
    %61 = vector.load %arg2[%60, %c0_27, %c0_28] : memref<64x1x128xf32, #tpu.memory_space<vmem>>, vector<1x1x128xf32>
    %62 = vector.shape_cast %61 : vector<1x1x128xf32> to vector<1x128xf32>
    %c13 = arith.constant 13 : index
    %63 = memref.load %arg0[%c13] : memref<16xi32, #tpu.memory_space<smem>>
    %64 = arith.index_cast %63 : i32 to index
    %c0_29 = arith.constant 0 : index
    %c0_30 = arith.constant 0 : index
    %65 = vector.load %arg2[%64, %c0_29, %c0_30] : memref<64x1x128xf32, #tpu.memory_space<vmem>>, vector<1x1x128xf32>
    %66 = vector.shape_cast %65 : vector<1x1x128xf32> to vector<1x128xf32>
    %67 = tpu.concatenate %62, %66 in 0 : vector<1x128xf32>, vector<1x128xf32> -> vector<2x128xf32>
    %c6 = arith.constant 6 : index
    %68 = memref.load %arg0[%c6] : memref<16xi32, #tpu.memory_space<smem>>
    %69 = arith.index_cast %68 : i32 to index
    %c0_31 = arith.constant 0 : index
    %c0_32 = arith.constant 0 : index
    %70 = vector.load %arg2[%69, %c0_31, %c0_32] : memref<64x1x128xf32, #tpu.memory_space<vmem>>, vector<1x1x128xf32>
    %71 = vector.shape_cast %70 : vector<1x1x128xf32> to vector<1x128xf32>
    %c14 = arith.constant 14 : index
    %72 = memref.load %arg0[%c14] : memref<16xi32, #tpu.memory_space<smem>>
    %73 = arith.index_cast %72 : i32 to index
    %c0_33 = arith.constant 0 : index
    %c0_34 = arith.constant 0 : index
    %74 = vector.load %arg2[%73, %c0_33, %c0_34] : memref<64x1x128xf32, #tpu.memory_space<vmem>>, vector<1x1x128xf32>
    %75 = vector.shape_cast %74 : vector<1x1x128xf32> to vector<1x128xf32>
    %76 = tpu.concatenate %71, %75 in 0 : vector<1x128xf32>, vector<1x128xf32> -> vector<2x128xf32>
    %c7 = arith.constant 7 : index
    %77 = memref.load %arg0[%c7] : memref<16xi32, #tpu.memory_space<smem>>
    %78 = arith.index_cast %77 : i32 to index
    %c0_35 = arith.constant 0 : index
    %c0_36 = arith.constant 0 : index
    %79 = vector.load %arg2[%78, %c0_35, %c0_36] : memref<64x1x128xf32, #tpu.memory_space<vmem>>, vector<1x1x128xf32>
    %80 = vector.shape_cast %79 : vector<1x1x128xf32> to vector<1x128xf32>
    %c15 = arith.constant 15 : index
    %81 = memref.load %arg0[%c15] : memref<16xi32, #tpu.memory_space<smem>>
    %82 = arith.index_cast %81 : i32 to index
    %c0_37 = arith.constant 0 : index
    %c0_38 = arith.constant 0 : index
    %83 = vector.load %arg2[%82, %c0_37, %c0_38] : memref<64x1x128xf32, #tpu.memory_space<vmem>>, vector<1x1x128xf32>
    %84 = vector.shape_cast %83 : vector<1x1x128xf32> to vector<1x128xf32>
    %85 = tpu.concatenate %80, %84 in 0 : vector<1x128xf32>, vector<1x128xf32> -> vector<2x128xf32>
    %cst_39 = arith.constant 0.000000e+00 : f32
    %86 = vector.broadcast %cst_39 : f32 to vector<2x32xf32>
    %cst_40 = arith.constant 0.000000e+00 : f32
    %87 = vector.broadcast %cst_40 : f32 to vector<2x32xf32>
    %cst_41 = arith.constant dense<0.000000e+00> : vector<2x128xf32>
    %88 = tpu.matmul %86, %0, %cst_41 {dimension_numbers = #tpu.dot_dimension_numbers<[1], [0], [0], [1], [0, 0, 1, 1], [], []>} : vector<2x32xf32>, vector<32x128xf32>, vector<2x128xf32> -> vector<2x128xf32>
    %89 = arith.addf %13, %88 : vector<2x128xf32>
    %90 = vector.broadcast %9 : vector<1x128xf32> to vector<2x128xf32>
    %91 = arith.mulf %90, %89 : vector<2x128xf32>
    %92 = math.tanh %91 : vector<2x128xf32>
    %93 = vector.broadcast %9 : vector<1x128xf32> to vector<2x128xf32>
    %94 = arith.mulf %93, %92 : vector<2x128xf32>
    %95 = vector.broadcast %12 : vector<1x128xf32> to vector<2x128xf32>
    %96 = arith.addf %94, %95 : vector<2x128xf32>
    %97 = vector.extract_strided_slice %96 {offsets = [0, 0], sizes = [2, 32], strides = [1, 1]} : vector<2x128xf32> to vector<2x32xf32>
    %98 = vector.extract_strided_slice %96 {offsets = [0, 32], sizes = [2, 32], strides = [1, 1]} : vector<2x128xf32> to vector<2x32xf32>
    %99 = vector.extract_strided_slice %96 {offsets = [0, 64], sizes = [2, 32], strides = [1, 1]} : vector<2x128xf32> to vector<2x32xf32>
    %100 = vector.extract_strided_slice %96 {offsets = [0, 96], sizes = [2, 32], strides = [1, 1]} : vector<2x128xf32> to vector<2x32xf32>
    %101 = arith.mulf %98, %87 : vector<2x32xf32>
    %102 = arith.mulf %97, %99 : vector<2x32xf32>
    %103 = arith.addf %101, %102 : vector<2x32xf32>
    %104 = math.tanh %103 : vector<2x32xf32>
    %105 = arith.mulf %100, %104 : vector<2x32xf32>
    %cst_42 = arith.constant dense<0.000000e+00> : vector<2x128xf32>
    %106 = tpu.matmul %105, %0, %cst_42 {dimension_numbers = #tpu.dot_dimension_numbers<[1], [0], [0], [1], [0, 0, 1, 1], [], []>} : vector<2x32xf32>, vector<32x128xf32>, vector<2x128xf32> -> vector<2x128xf32>
    %107 = arith.addf %22, %106 : vector<2x128xf32>
    %108 = vector.broadcast %9 : vector<1x128xf32> to vector<2x128xf32>
    %109 = arith.mulf %108, %107 : vector<2x128xf32>
    %110 = math.tanh %109 : vector<2x128xf32>
    %111 = vector.broadcast %9 : vector<1x128xf32> to vector<2x128xf32>
    %112 = arith.mulf %111, %110 : vector<2x128xf32>
    %113 = vector.broadcast %12 : vector<1x128xf32> to vector<2x128xf32>
    %114 = arith.addf %112, %113 : vector<2x128xf32>
    %115 = vector.extract_strided_slice %114 {offsets = [0, 0], sizes = [2, 32], strides = [1, 1]} : vector<2x128xf32> to vector<2x32xf32>
    %116 = vector.extract_strided_slice %114 {offsets = [0, 32], sizes = [2, 32], strides = [1, 1]} : vector<2x128xf32> to vector<2x32xf32>
    %117 = vector.extract_strided_slice %114 {offsets = [0, 64], sizes = [2, 32], strides = [1, 1]} : vector<2x128xf32> to vector<2x32xf32>
    %118 = vector.extract_strided_slice %114 {offsets = [0, 96], sizes = [2, 32], strides = [1, 1]} : vector<2x128xf32> to vector<2x32xf32>
    %119 = arith.mulf %116, %103 : vector<2x32xf32>
    %120 = arith.mulf %115, %117 : vector<2x32xf32>
    %121 = arith.addf %119, %120 : vector<2x32xf32>
    %122 = math.tanh %121 : vector<2x32xf32>
    %123 = arith.mulf %118, %122 : vector<2x32xf32>
    %cst_43 = arith.constant dense<0.000000e+00> : vector<2x128xf32>
    %124 = tpu.matmul %123, %0, %cst_43 {dimension_numbers = #tpu.dot_dimension_numbers<[1], [0], [0], [1], [0, 0, 1, 1], [], []>} : vector<2x32xf32>, vector<32x128xf32>, vector<2x128xf32> -> vector<2x128xf32>
    %125 = arith.addf %31, %124 : vector<2x128xf32>
    %126 = vector.broadcast %9 : vector<1x128xf32> to vector<2x128xf32>
    %127 = arith.mulf %126, %125 : vector<2x128xf32>
    %128 = math.tanh %127 : vector<2x128xf32>
    %129 = vector.broadcast %9 : vector<1x128xf32> to vector<2x128xf32>
    %130 = arith.mulf %129, %128 : vector<2x128xf32>
    %131 = vector.broadcast %12 : vector<1x128xf32> to vector<2x128xf32>
    %132 = arith.addf %130, %131 : vector<2x128xf32>
    %133 = vector.extract_strided_slice %132 {offsets = [0, 0], sizes = [2, 32], strides = [1, 1]} : vector<2x128xf32> to vector<2x32xf32>
    %134 = vector.extract_strided_slice %132 {offsets = [0, 32], sizes = [2, 32], strides = [1, 1]} : vector<2x128xf32> to vector<2x32xf32>
    %135 = vector.extract_strided_slice %132 {offsets = [0, 64], sizes = [2, 32], strides = [1, 1]} : vector<2x128xf32> to vector<2x32xf32>
    %136 = vector.extract_strided_slice %132 {offsets = [0, 96], sizes = [2, 32], strides = [1, 1]} : vector<2x128xf32> to vector<2x32xf32>
    %137 = arith.mulf %134, %121 : vector<2x32xf32>
    %138 = arith.mulf %133, %135 : vector<2x32xf32>
    %139 = arith.addf %137, %138 : vector<2x32xf32>
    %140 = math.tanh %139 : vector<2x32xf32>
    %141 = arith.mulf %136, %140 : vector<2x32xf32>
    %cst_44 = arith.constant dense<0.000000e+00> : vector<2x128xf32>
    %142 = tpu.matmul %141, %0, %cst_44 {dimension_numbers = #tpu.dot_dimension_numbers<[1], [0], [0], [1], [0, 0, 1, 1], [], []>} : vector<2x32xf32>, vector<32x128xf32>, vector<2x128xf32> -> vector<2x128xf32>
    %143 = arith.addf %40, %142 : vector<2x128xf32>
    %144 = vector.broadcast %9 : vector<1x128xf32> to vector<2x128xf32>
    %145 = arith.mulf %144, %143 : vector<2x128xf32>
    %146 = math.tanh %145 : vector<2x128xf32>
    %147 = vector.broadcast %9 : vector<1x128xf32> to vector<2x128xf32>
    %148 = arith.mulf %147, %146 : vector<2x128xf32>
    %149 = vector.broadcast %12 : vector<1x128xf32> to vector<2x128xf32>
    %150 = arith.addf %148, %149 : vector<2x128xf32>
    %151 = vector.extract_strided_slice %150 {offsets = [0, 0], sizes = [2, 32], strides = [1, 1]} : vector<2x128xf32> to vector<2x32xf32>
    %152 = vector.extract_strided_slice %150 {offsets = [0, 32], sizes = [2, 32], strides = [1, 1]} : vector<2x128xf32> to vector<2x32xf32>
    %153 = vector.extract_strided_slice %150 {offsets = [0, 64], sizes = [2, 32], strides = [1, 1]} : vector<2x128xf32> to vector<2x32xf32>
    %154 = vector.extract_strided_slice %150 {offsets = [0, 96], sizes = [2, 32], strides = [1, 1]} : vector<2x128xf32> to vector<2x32xf32>
    %155 = arith.mulf %152, %139 : vector<2x32xf32>
    %156 = arith.mulf %151, %153 : vector<2x32xf32>
    %157 = arith.addf %155, %156 : vector<2x32xf32>
    %158 = math.tanh %157 : vector<2x32xf32>
    %159 = arith.mulf %154, %158 : vector<2x32xf32>
    %cst_45 = arith.constant dense<0.000000e+00> : vector<2x128xf32>
    %160 = tpu.matmul %159, %0, %cst_45 {dimension_numbers = #tpu.dot_dimension_numbers<[1], [0], [0], [1], [0, 0, 1, 1], [], []>} : vector<2x32xf32>, vector<32x128xf32>, vector<2x128xf32> -> vector<2x128xf32>
    %161 = arith.addf %49, %160 : vector<2x128xf32>
    %162 = vector.broadcast %9 : vector<1x128xf32> to vector<2x128xf32>
    %163 = arith.mulf %162, %161 : vector<2x128xf32>
    %164 = math.tanh %163 : vector<2x128xf32>
    %165 = vector.broadcast %9 : vector<1x128xf32> to vector<2x128xf32>
    %166 = arith.mulf %165, %164 : vector<2x128xf32>
    %167 = vector.broadcast %12 : vector<1x128xf32> to vector<2x128xf32>
    %168 = arith.addf %166, %167 : vector<2x128xf32>
    %169 = vector.extract_strided_slice %168 {offsets = [0, 0], sizes = [2, 32], strides = [1, 1]} : vector<2x128xf32> to vector<2x32xf32>
    %170 = vector.extract_strided_slice %168 {offsets = [0, 32], sizes = [2, 32], strides = [1, 1]} : vector<2x128xf32> to vector<2x32xf32>
    %171 = vector.extract_strided_slice %168 {offsets = [0, 64], sizes = [2, 32], strides = [1, 1]} : vector<2x128xf32> to vector<2x32xf32>
    %172 = vector.extract_strided_slice %168 {offsets = [0, 96], sizes = [2, 32], strides = [1, 1]} : vector<2x128xf32> to vector<2x32xf32>
    %173 = arith.mulf %170, %157 : vector<2x32xf32>
    %174 = arith.mulf %169, %171 : vector<2x32xf32>
    %175 = arith.addf %173, %174 : vector<2x32xf32>
    %176 = math.tanh %175 : vector<2x32xf32>
    %177 = arith.mulf %172, %176 : vector<2x32xf32>
    %cst_46 = arith.constant dense<0.000000e+00> : vector<2x128xf32>
    %178 = tpu.matmul %177, %0, %cst_46 {dimension_numbers = #tpu.dot_dimension_numbers<[1], [0], [0], [1], [0, 0, 1, 1], [], []>} : vector<2x32xf32>, vector<32x128xf32>, vector<2x128xf32> -> vector<2x128xf32>
    %179 = arith.addf %58, %178 : vector<2x128xf32>
    %180 = vector.broadcast %9 : vector<1x128xf32> to vector<2x128xf32>
    %181 = arith.mulf %180, %179 : vector<2x128xf32>
    %182 = math.tanh %181 : vector<2x128xf32>
    %183 = vector.broadcast %9 : vector<1x128xf32> to vector<2x128xf32>
    %184 = arith.mulf %183, %182 : vector<2x128xf32>
    %185 = vector.broadcast %12 : vector<1x128xf32> to vector<2x128xf32>
    %186 = arith.addf %184, %185 : vector<2x128xf32>
    %187 = vector.extract_strided_slice %186 {offsets = [0, 0], sizes = [2, 32], strides = [1, 1]} : vector<2x128xf32> to vector<2x32xf32>
    %188 = vector.extract_strided_slice %186 {offsets = [0, 32], sizes = [2, 32], strides = [1, 1]} : vector<2x128xf32> to vector<2x32xf32>
    %189 = vector.extract_strided_slice %186 {offsets = [0, 64], sizes = [2, 32], strides = [1, 1]} : vector<2x128xf32> to vector<2x32xf32>
    %190 = vector.extract_strided_slice %186 {offsets = [0, 96], sizes = [2, 32], strides = [1, 1]} : vector<2x128xf32> to vector<2x32xf32>
    %191 = arith.mulf %188, %175 : vector<2x32xf32>
    %192 = arith.mulf %187, %189 : vector<2x32xf32>
    %193 = arith.addf %191, %192 : vector<2x32xf32>
    %194 = math.tanh %193 : vector<2x32xf32>
    %195 = arith.mulf %190, %194 : vector<2x32xf32>
    %cst_47 = arith.constant dense<0.000000e+00> : vector<2x128xf32>
    %196 = tpu.matmul %195, %0, %cst_47 {dimension_numbers = #tpu.dot_dimension_numbers<[1], [0], [0], [1], [0, 0, 1, 1], [], []>} : vector<2x32xf32>, vector<32x128xf32>, vector<2x128xf32> -> vector<2x128xf32>
    %197 = arith.addf %67, %196 : vector<2x128xf32>
    %198 = vector.broadcast %9 : vector<1x128xf32> to vector<2x128xf32>
    %199 = arith.mulf %198, %197 : vector<2x128xf32>
    %200 = math.tanh %199 : vector<2x128xf32>
    %201 = vector.broadcast %9 : vector<1x128xf32> to vector<2x128xf32>
    %202 = arith.mulf %201, %200 : vector<2x128xf32>
    %203 = vector.broadcast %12 : vector<1x128xf32> to vector<2x128xf32>
    %204 = arith.addf %202, %203 : vector<2x128xf32>
    %205 = vector.extract_strided_slice %204 {offsets = [0, 0], sizes = [2, 32], strides = [1, 1]} : vector<2x128xf32> to vector<2x32xf32>
    %206 = vector.extract_strided_slice %204 {offsets = [0, 32], sizes = [2, 32], strides = [1, 1]} : vector<2x128xf32> to vector<2x32xf32>
    %207 = vector.extract_strided_slice %204 {offsets = [0, 64], sizes = [2, 32], strides = [1, 1]} : vector<2x128xf32> to vector<2x32xf32>
    %208 = vector.extract_strided_slice %204 {offsets = [0, 96], sizes = [2, 32], strides = [1, 1]} : vector<2x128xf32> to vector<2x32xf32>
    %209 = arith.mulf %206, %193 : vector<2x32xf32>
    %210 = arith.mulf %205, %207 : vector<2x32xf32>
    %211 = arith.addf %209, %210 : vector<2x32xf32>
    %212 = math.tanh %211 : vector<2x32xf32>
    %213 = arith.mulf %208, %212 : vector<2x32xf32>
    %cst_48 = arith.constant dense<0.000000e+00> : vector<2x128xf32>
    %214 = tpu.matmul %213, %0, %cst_48 {dimension_numbers = #tpu.dot_dimension_numbers<[1], [0], [0], [1], [0, 0, 1, 1], [], []>} : vector<2x32xf32>, vector<32x128xf32>, vector<2x128xf32> -> vector<2x128xf32>
    %215 = arith.addf %76, %214 : vector<2x128xf32>
    %216 = vector.broadcast %9 : vector<1x128xf32> to vector<2x128xf32>
    %217 = arith.mulf %216, %215 : vector<2x128xf32>
    %218 = math.tanh %217 : vector<2x128xf32>
    %219 = vector.broadcast %9 : vector<1x128xf32> to vector<2x128xf32>
    %220 = arith.mulf %219, %218 : vector<2x128xf32>
    %221 = vector.broadcast %12 : vector<1x128xf32> to vector<2x128xf32>
    %222 = arith.addf %220, %221 : vector<2x128xf32>
    %223 = vector.extract_strided_slice %222 {offsets = [0, 0], sizes = [2, 32], strides = [1, 1]} : vector<2x128xf32> to vector<2x32xf32>
    %224 = vector.extract_strided_slice %222 {offsets = [0, 32], sizes = [2, 32], strides = [1, 1]} : vector<2x128xf32> to vector<2x32xf32>
    %225 = vector.extract_strided_slice %222 {offsets = [0, 64], sizes = [2, 32], strides = [1, 1]} : vector<2x128xf32> to vector<2x32xf32>
    %226 = vector.extract_strided_slice %222 {offsets = [0, 96], sizes = [2, 32], strides = [1, 1]} : vector<2x128xf32> to vector<2x32xf32>
    %227 = arith.mulf %224, %211 : vector<2x32xf32>
    %228 = arith.mulf %223, %225 : vector<2x32xf32>
    %229 = arith.addf %227, %228 : vector<2x32xf32>
    %230 = math.tanh %229 : vector<2x32xf32>
    %231 = arith.mulf %226, %230 : vector<2x32xf32>
    %cst_49 = arith.constant dense<0.000000e+00> : vector<2x128xf32>
    %232 = tpu.matmul %231, %0, %cst_49 {dimension_numbers = #tpu.dot_dimension_numbers<[1], [0], [0], [1], [0, 0, 1, 1], [], []>} : vector<2x32xf32>, vector<32x128xf32>, vector<2x128xf32> -> vector<2x128xf32>
    %233 = arith.addf %85, %232 : vector<2x128xf32>
    %234 = vector.broadcast %9 : vector<1x128xf32> to vector<2x128xf32>
    %235 = arith.mulf %234, %233 : vector<2x128xf32>
    %236 = math.tanh %235 : vector<2x128xf32>
    %237 = vector.broadcast %9 : vector<1x128xf32> to vector<2x128xf32>
    %238 = arith.mulf %237, %236 : vector<2x128xf32>
    %239 = vector.broadcast %12 : vector<1x128xf32> to vector<2x128xf32>
    %240 = arith.addf %238, %239 : vector<2x128xf32>
    %241 = vector.extract_strided_slice %240 {offsets = [0, 0], sizes = [2, 32], strides = [1, 1]} : vector<2x128xf32> to vector<2x32xf32>
    %242 = vector.extract_strided_slice %240 {offsets = [0, 32], sizes = [2, 32], strides = [1, 1]} : vector<2x128xf32> to vector<2x32xf32>
    %243 = vector.extract_strided_slice %240 {offsets = [0, 64], sizes = [2, 32], strides = [1, 1]} : vector<2x128xf32> to vector<2x32xf32>
    %244 = vector.extract_strided_slice %240 {offsets = [0, 96], sizes = [2, 32], strides = [1, 1]} : vector<2x128xf32> to vector<2x32xf32>
    %245 = arith.mulf %242, %229 : vector<2x32xf32>
    %246 = arith.mulf %241, %243 : vector<2x32xf32>
    %247 = arith.addf %245, %246 : vector<2x32xf32>
    %248 = math.tanh %247 : vector<2x32xf32>
    %249 = arith.mulf %244, %248 : vector<2x32xf32>
    %250 = tpu.concatenate %105, %123, %141, %159, %177, %195, %213, %231, %249 in 0 : vector<2x32xf32>, vector<2x32xf32>, vector<2x32xf32>, vector<2x32xf32>, vector<2x32xf32>, vector<2x32xf32>, vector<2x32xf32>, vector<2x32xf32>, vector<2x32xf32> -> vector<18x32xf32>
    %c0_50 = arith.constant 0 : index
    %c0_51 = arith.constant 0 : index
    %251 = vector.load %arg4[%c0_50, %c0_51] : memref<32x128xf32, #tpu.memory_space<vmem>>, vector<32x128xf32>
    %cst_52 = arith.constant dense<0.000000e+00> : vector<18x128xf32>
    %252 = tpu.matmul %250, %251, %cst_52 {dimension_numbers = #tpu.dot_dimension_numbers<[1], [0], [0], [1], [0, 0, 1, 1], [], []>} : vector<18x32xf32>, vector<32x128xf32>, vector<18x128xf32> -> vector<18x128xf32>
    %c0_53 = arith.constant 0 : index
    %c0_54 = arith.constant 0 : index
    %253 = vector.load %arg5[%c0_53, %c0_54] : memref<1x128xf32, #tpu.memory_space<vmem>>, vector<1x128xf32>
    %254 = vector.broadcast %253 : vector<1x128xf32> to vector<18x128xf32>
    %255 = arith.addf %252, %254 : vector<18x128xf32>
    %c0_55 = arith.constant 0 : index
    %c0_56 = arith.constant 0 : index
    %256 = vector.load %arg6[%c0_55, %c0_56] : memref<18x128xf32, #tpu.memory_space<vmem>>, vector<18x128xf32>
    tpu.vector_store %arg6[%c0_55, %c0_56], %255 {strides = array<i32>} : memref<18x128xf32, #tpu.memory_space<vmem>>, vector<18x128xf32>,
    return
  }
}

</mosaic_0001>

<llo_original>
// kernel: caption_model_forward.1
$region0: #{caption_model_forward.1}
  #allocation0 [shape = 'u32[]', space=smem, size = 0x4, offset = 0x4, fixed_abs, tag = 'smem constant byte address 0x4 - core index']
  #allocation1 [shape = 'u32[144,128]{1,0:T(1,128)}', space=vmem, size = 0x12000, scoped, tag = 'internal scratch']
  %s0 = inlined_call_operand.vmem [shape: s32[16], index: 0, kind: input, shape index: {}]
  %s1 = inlined_call_operand.vmem [shape: f32[2,128], index: 1, kind: input, shape index: {}]
  %s2 = inlined_call_operand.vmem [shape: f32[64,1,128], index: 2, kind: input, shape index: {}]
  %s3 = inlined_call_operand.vmem [shape: f32[32,128], index: 3, kind: input, shape index: {}]
  %s4 = inlined_call_operand.vmem [shape: f32[32,128], index: 4, kind: input, shape index: {}]
  %s5 = inlined_call_operand.vmem [shape: f32[1,128], index: 5, kind: input, shape index: {}]
  %s6 = inlined_call_operand.vmem [shape: f32[18,128], index: 6, kind: output, shape index: {}]
  %s7 = sld [smem:[#allocation0]]
  $region38: #{caption_model_forward.1} parent=0
    _
  %s9 = ssub.s32 1, %s7
  %s10 = scalar_select 0, %s9, %s7
  $region1: #{caption_model_forward.1} parent=0
    #allocation2 [shape = 'u8[512]{0}', space=smem, size = 0x200, scoped, tag = 'input window, operand 0, single buffered']
    #allocation3 [shape = 's32[1]{0}', space=sflag, size = 0x4, scoped, tag = 'scoped memory for caption_model_forward.1']
    %11 = vsyncpa [#allocation3], 0
    // Predicated region
    $region2: #{caption_model_forward.1} parent=1 // pred_check
      _
    $region3: #{caption_model_forward.1} parent=1 // pred_check_branch
      %13 = sbr.rel (0) target = $region5
    $region4: #{caption_model_forward.1} parent=1 // pred_region
      %s15 = ssub.s32 16, 16
      %16 = vsyncadd [#allocation3], %s15
      %s18 = sshll.u32 %s0, 4
      %s19 = int_to_ptr.vmem [resolvable:$true] %s18
      %21 = dma.vmem_to_smem %s19, 16, [#allocation2], [#allocation3]
    $region5: #{caption_model_forward.1} parent=1 // pred_fallthru
      _
    // Predicated region
    $region6: #{caption_model_forward.1} parent=1 // pred_check
      _
    $region7: #{caption_model_forward.1} parent=1 // pred_check_branch
      %23 = sbr.rel (0) target = $region9
    $region8: #{caption_model_forward.1} parent=1 // pred_region
      _
    $region9: #{caption_model_forward.1} parent=1 // pred_fallthru
      _
    // Predicated region
    $region10: #{caption_model_forward.1} parent=1 // pred_check
      _
    $region11: #{caption_model_forward.1} parent=1 // pred_check_branch
      %25 = sbr.rel (0) target = $region13
    $region12: #{caption_model_forward.1} parent=1 // pred_region
      _
    $region13: #{caption_model_forward.1} parent=1 // pred_fallthru
      _
    // Predicated region
    $region14: #{caption_model_forward.1} parent=1 // pred_check
      _
    $region15: #{caption_model_forward.1} parent=1 // pred_check_branch
      %27 = sbr.rel (0) target = $region17
    $region16: #{caption_model_forward.1} parent=1 // pred_region
      _
    $region17: #{caption_model_forward.1} parent=1 // pred_fallthru
      _
    // Predicated region
    $region18: #{caption_model_forward.1} parent=1 // pred_check
      _
    $region19: #{caption_model_forward.1} parent=1 // pred_check_branch
      %29 = sbr.rel (0) target = $region21
    $region20: #{caption_model_forward.1} parent=1 // pred_region
      _
    $region21: #{caption_model_forward.1} parent=1 // pred_fallthru
      _
    // Predicated region
    $region22: #{caption_model_forward.1} parent=1 // pred_check
      _
    $region23: #{caption_model_forward.1} parent=1 // pred_check_branch
      %31 = sbr.rel (0) target = $region25
    $region24: #{caption_model_forward.1} parent=1 // pred_region
      _
    $region25: #{caption_model_forward.1} parent=1 // pred_fallthru
      _
    // Predicated region
    $region26: #{caption_model_forward.1} parent=1 // pred_check
      _
    $region27: #{caption_model_forward.1} parent=1 // pred_check_branch
      %33 = sbr.rel (0) target = $region29
    $region28: #{caption_model_forward.1} parent=1 // pred_region
      %34 = dma.done [#allocation3], 16
    $region29: #{caption_model_forward.1} parent=1 // pred_fallthru
      _
    %35 = sfence
    %v36 = vld [vmem:[%s3] sm:$0xff]
    %v37 = vld [vmem:[%s3 + $0x8] sm:$0xff]
    %v38 = vld [vmem:[%s3 + $0x10] sm:$0xff]
    %v39 = vld [vmem:[%s3 + $0x18] sm:$0xff]
    %v40 = vlaneseq
    %v41 = vand.u32 %v40, 127
    %vm42 = vcmp.ge.s32.totalorder %v41, 64
    %vm43 = vcmp.lt.s32.totalorder %v41, 96
    %vm44 = vmand %vm42, %vm43
    %v45 = vsel %vm44, 1.0, 0.5
    %v46 = vsel %vm44, 0.0, 0.5
    %v47 = vld [vmem:[%s1] sm:$0x3]
    %s48 = sld [smem:[#allocation2]]
    %s49 = scalar_lea.vmem %s2, %s48
    %v50 = vld [vmem:[%s49] sm:$0x1]
    %s51 = sld [smem:[#allocation2 + $0x8]]
    %s52 = scalar_lea.vmem %s2, %s51
    %v53 = vld [vmem:[%s52] sm:$0x1]
    %v55 = vlaneseq
    %v56 = vshrl.u32 %v55, 7
    %v57 = vsub.s32 0, %v56
    %v58 = vrot.slane %v53, %v57
    %vm60 = vcmask 1040384
    %v61 = vsel %vm60, %v50, %v58
    %s62 = sld [smem:[#allocation2 + $0x1]]
    %s63 = scalar_lea.vmem %s2, %s62
    %v64 = vld [vmem:[%s63] sm:$0x1]
    %s65 = sld [smem:[#allocation2 + $0x9]]
    %s66 = scalar_lea.vmem %s2, %s65
    %v67 = vld [vmem:[%s66] sm:$0x1]
    %v69 = vlaneseq
    %v70 = vshrl.u32 %v69, 7
    %v71 = vsub.s32 0, %v70
    %v72 = vrot.slane %v67, %v71
    %v74 = vsel %vm60, %v64, %v72
    %s75 = sld [smem:[#allocation2 + $0x2]]
    %s76 = scalar_lea.vmem %s2, %s75
    %v77 = vld [vmem:[%s76] sm:$0x1]
    %s78 = sld [smem:[#allocation2 + $0xa]]
    %s79 = scalar_lea.vmem %s2, %s78
    %v80 = vld [vmem:[%s79] sm:$0x1]
    %v82 = vlaneseq
    %v83 = vshrl.u32 %v82, 7
    %v84 = vsub.s32 0, %v83
    %v85 = vrot.slane %v80, %v84
    %v87 = vsel %vm60, %v77, %v85
    %s88 = sld [smem:[#allocation2 + $0x3]]
    %s89 = scalar_lea.vmem %s2, %s88
    %v90 = vld [vmem:[%s89] sm:$0x1]
    %s91 = sld [smem:[#allocation2 + $0xb]]
    %s92 = scalar_lea.vmem %s2, %s91
    %v93 = vld [vmem:[%s92] sm:$0x1]
    %v95 = vlaneseq
    %v96 = vshrl.u32 %v95, 7
    %v97 = vsub.s32 0, %v96
    %v98 = vrot.slane %v93, %v97
    %v100 = vsel %vm60, %v90, %v98
    %s101 = sld [smem:[#allocation2 + $0x4]]
    %s102 = scalar_lea.vmem %s2, %s101
    %v103 = vld [vmem:[%s102] sm:$0x1]
    %s104 = sld [smem:[#allocation2 + $0xc]]
    %s105 = scalar_lea.vmem %s2, %s104
    %v106 = vld [vmem:[%s105] sm:$0x1]
    %v108 = vlaneseq
    %v109 = vshrl.u32 %v108, 7
    %v110 = vsub.s32 0, %v109
    %v111 = vrot.slane %v106, %v110
    %v113 = vsel %vm60, %v103, %v111
    %s114 = sld [smem:[#allocation2 + $0x5]]
    %s115 = scalar_lea.vmem %s2, %s114
    %v116 = vld [vmem:[%s115] sm:$0x1]
    %s117 = sld [smem:[#allocation2 + $0xd]]
    %s118 = scalar_lea.vmem %s2, %s117
    %v119 = vld [vmem:[%s118] sm:$0x1]
    %v121 = vlaneseq
    %v122 = vshrl.u32 %v121, 7
    %v123 = vsub.s32 0, %v122
    %v124 = vrot.slane %v119, %v123
    %v126 = vsel %vm60, %v116, %v124
    %s127 = sld [smem:[#allocation2 + $0x6]]
    %s128 = scalar_lea.vmem %s2, %s127
    %v129 = vld [vmem:[%s128] sm:$0x1]
    %s130 = sld [smem:[#allocation2 + $0xe]]
    %s131 = scalar_lea.vmem %s2, %s130
    %v132 = vld [vmem:[%s131] sm:$0x1]
    %v134 = vlaneseq
    %v135 = vshrl.u32 %v134, 7
    %v136 = vsub.s32 0, %v135
    %v137 = vrot.slane %v132, %v136
    %v139 = vsel %vm60, %v129, %v137
    %s140 = sld [smem:[#allocation2 + $0x7]]
    %s141 = scalar_lea.vmem %s2, %s140
    %v142 = vld [vmem:[%s141] sm:$0x1]
    %s143 = sld [smem:[#allocation2 + $0xf]]
    %s144 = scalar_lea.vmem %s2, %s143
    %v145 = vld [vmem:[%s144] sm:$0x1]
    %v147 = vlaneseq
    %v148 = vshrl.u32 %v147, 7
    %v149 = vsub.s32 0, %v148
    %v150 = vrot.slane %v145, %v149
    %v152 = vsel %vm60, %v142, %v150
    %vm153 = vcmask 261120
    %v155 = vsel %vm153, 0.0, 0
    %157 = vmatprep.subr.mxu0 0.0
    %158 = vmatpush1.msra.mxu0 %v36
    %159 = vmatprep.subr.mxu0 0.0
    %160 = vmatpush1.msra.mxu0 %v37
    %161 = vmatprep.subr.mxu0 0.0
    %162 = vmatpush1.msra.mxu0 %v38
    %163 = vmatprep.subr.mxu0 0.0
    %164 = vmatpush1.msra.mxu0 %v39
    %165 = vmatprep.subr.mxu0 0.0
    %166 = vmatpush1.msra.mxu0 0.0
    %167 = vmatprep.subr.mxu0 0.0
    %168 = vmatpush1.msra.mxu0 0.0
    %169 = vmatprep.subr.mxu0 0.0
    %170 = vmatpush1.msra.mxu0 0.0
    %171 = vmatprep.subr.mxu0 0.0
    %172 = vmatpush1.msra.mxu0 0.0
    %173 = vmatprep.subr.mxu0 0.0
    %174 = vmatpush1.msra.mxu0 0.0
    %175 = vmatprep.subr.mxu0 0.0
    %176 = vmatpush1.msra.mxu0 0.0
    %177 = vmatprep.subr.mxu0 0.0
    %178 = vmatpush1.msra.mxu0 0.0
    %179 = vmatprep.subr.mxu0 0.0
    %180 = vmatpush1.msra.mxu0 0.0
    %181 = vmatprep.subr.mxu0 0.0
    %182 = vmatpush1.msra.mxu0 0.0
    %183 = vmatprep.subr.mxu0 0.0
    %184 = vmatpush1.msra.mxu0 0.0
    %185 = vmatprep.subr.mxu0 0.0
    %186 = vmatpush1.msra.mxu0 0.0
    %187 = vmatprep.subr.mxu0 0.0
    %188 = vmatpush1.msra.mxu0 0.0
    %189 = vmatprep.subr.mxu0 0.0
    %190 = vmatpush1.msra.mxu0 0.0
    %191 = vmatprep.subr.mxu0 0.0
    %192 = vmatpush1.msra.mxu0 0.0
    %193 = vmatprep.subr.mxu0 0.0
    %194 = vmatpush1.msra.mxu0 0.0
    %195 = vmatprep.subr.mxu0 0.0
    %196 = vmatpush1.msra.mxu0 0.0
    %197 = vmatprep.subr.mxu0 0.0
    %198 = vmatpush1.msra.mxu0 0.0
    %199 = vmatprep.subr.mxu0 0.0
    %200 = vmatpush1.msra.mxu0 0.0
    %201 = vmatprep.subr.mxu0 0.0
    %202 = vmatpush1.msra.mxu0 0.0
    %203 = vmatprep.subr.mxu0 0.0
    %204 = vmatpush1.msra.mxu0 0.0
    %205 = vmatprep.subr.mxu0 0.0
    %206 = vmatpush1.msra.mxu0 0.0
    %207 = vmatprep.subr.mxu0 0.0
    %208 = vmatpush1.msra.mxu0 0.0
    %209 = vmatprep.subr.mxu0 0.0
    %210 = vmatpush1.msra.mxu0 0.0
    %211 = vmatprep.subr.mxu0 0.0
    %212 = vmatpush1.msra.mxu0 0.0
    %213 = vmatprep.subr.mxu0 0.0
    %214 = vmatpush1.msra.mxu0 0.0
    %215 = vmatprep.subr.mxu0 0.0
    %216 = vmatpush1.msra.mxu0 0.0
    %217 = vmatprep.subr.mxu0 0.0
    %218 = vmatpush1.msra.mxu0 0.0
    %219 = vmatprep.subr.mxu0 0.0
    %220 = vmatpush1.msra.mxu0 0.0
    %221 = vmatprep.mubr.f32.mxu0 0.0
    %222 = vmatmul.mubr.f32.gmra.mrb[0].mxu0 %v155
    %v223 = vpop.f32.mrb[0].mxu0
    %v224 = vadd.f32 0.0, %v223
    %v225 = vpop.f32.mrb[0].mxu0
    %226 = vdwg.mxu0
    %v227 = vadd.f32 %v47, %v224
    %v228 = vmul.f32 %v45, %v227
    %v229 = vtanh.pop %v228
    %v230 = vmul.f32 %v45, %v229
    %v231 = vadd.f32 %v230, %v46
    %v232 = vmul.f32 %v231, 0.0
    %234 = vrot.lane.b32.xlu0 %v231, 64
    %v235 = vpop.permute.xlu0 %234
    %v237 = vmul.f32 %v231, %v235
    %239 = vrot.lane.b32.xlu0 %v237, 32
    %v240 = vpop.permute.xlu0 %239
    %v242 = vadd.f32 %v232, %v240
    %v243 = vtanh.pop %v242
    %245 = vrot.lane.b32.xlu0 %v243, 64
    %v246 = vpop.permute.xlu0 %245
    %v248 = vmul.f32 %v231, %v246
    %250 = vrot.lane.b32.xlu0 %v248, 32
    %v251 = vpop.permute.xlu0 %250
    %v252 = vsel %vm153, %v251, 0
    %254 = vmatprep.subr.mxu0 0.0
    %255 = vmatpush1.msra.mxu0 %v36
    %256 = vmatprep.subr.mxu0 0.0
    %257 = vmatpush1.msra.mxu0 %v37
    %258 = vmatprep.subr.mxu0 0.0
    %259 = vmatpush1.msra.mxu0 %v38
    %260 = vmatprep.subr.mxu0 0.0
    %261 = vmatpush1.msra.mxu0 %v39
    %262 = vmatprep.subr.mxu0 0.0
    %263 = vmatpush1.msra.mxu0 0.0
    %264 = vmatprep.subr.mxu0 0.0
    %265 = vmatpush1.msra.mxu0 0.0
    %266 = vmatprep.subr.mxu0 0.0
    %267 = vmatpush1.msra.mxu0 0.0
    %268 = vmatprep.subr.mxu0 0.0
    %269 = vmatpush1.msra.mxu0 0.0
    %270 = vmatprep.subr.mxu0 0.0
    %271 = vmatpush1.msra.mxu0 0.0
    %272 = vmatprep.subr.mxu0 0.0
    %273 = vmatpush1.msra.mxu0 0.0
    %274 = vmatprep.subr.mxu0 0.0
    %275 = vmatpush1.msra.mxu0 0.0
    %276 = vmatprep.subr.mxu0 0.0
    %277 = vmatpush1.msra.mxu0 0.0
    %278 = vmatprep.subr.mxu0 0.0
    %279 = vmatpush1.msra.mxu0 0.0
    %280 = vmatprep.subr.mxu0 0.0
    %281 = vmatpush1.msra.mxu0 0.0
    %282 = vmatprep.subr.mxu0 0.0
    %283 = vmatpush1.msra.mxu0 0.0
    %284 = vmatprep.subr.mxu0 0.0
    %285 = vmatpush1.msra.mxu0 0.0
    %286 = vmatprep.subr.mxu0 0.0
    %287 = vmatpush1.msra.mxu0 0.0
    %288 = vmatprep.subr.mxu0 0.0
    %289 = vmatpush1.msra.mxu0 0.0
    %290 = vmatprep.subr.mxu0 0.0
    %291 = vmatpush1.msra.mxu0 0.0
    %292 = vmatprep.subr.mxu0 0.0
    %293 = vmatpush1.msra.mxu0 0.0
    %294 = vmatprep.subr.mxu0 0.0
    %295 = vmatpush1.msra.mxu0 0.0
    %296 = vmatprep.subr.mxu0 0.0
    %297 = vmatpush1.msra.mxu0 0.0
    %298 = vmatprep.subr.mxu0 0.0
    %299 = vmatpush1.msra.mxu0 0.0
    %300 = vmatprep.subr.mxu0 0.0
    %301 = vmatpush1.msra.mxu0 0.0
    %302 = vmatprep.subr.mxu0 0.0
    %303 = vmatpush1.msra.mxu0 0.0
    %304 = vmatprep.subr.mxu0 0.0
    %305 = vmatpush1.msra.mxu0 0.0
    %306 = vmatprep.subr.mxu0 0.0
    %307 = vmatpush1.msra.mxu0 0.0
    %308 = vmatprep.subr.mxu0 0.0
    %309 = vmatpush1.msra.mxu0 0.0
    %310 = vmatprep.subr.mxu0 0.0
    %311 = vmatpush1.msra.mxu0 0.0
    %312 = vmatprep.subr.mxu0 0.0
    %313 = vmatpush1.msra.mxu0 0.0
    %314 = vmatprep.subr.mxu0 0.0
    %315 = vmatpush1.msra.mxu0 0.0
    %316 = vmatprep.subr.mxu0 0.0
    %317 = vmatpush1.msra.mxu0 0.0
    %318 = vmatprep.mubr.f32.mxu0 0.0
    %319 = vmatmul.mubr.f32.gmra.mrb[0].mxu0 %v252
    %v320 = vpop.f32.mrb[0].mxu0
    %v321 = vadd.f32 0.0, %v320
    %v322 = vpop.f32.mrb[0].mxu0
    %323 = vdwg.mxu0
    %v324 = vadd.f32 %v61, %v321
    %v325 = vmul.f32 %v45, %v324
    %v326 = vtanh.pop %v325
    %v327 = vmul.f32 %v45, %v326
    %v328 = vadd.f32 %v327, %v46
    %v329 = vmul.f32 %v328, %v242
    %331 = vrot.lane.b32.xlu0 %v328, 64
    %v332 = vpop.permute.xlu0 %331
    %v334 = vmul.f32 %v328, %v332
    %336 = vrot.lane.b32.xlu0 %v334, 32
    %v337 = vpop.permute.xlu0 %336
    %v339 = vadd.f32 %v329, %v337
    %v340 = vtanh.pop %v339
    %342 = vrot.lane.b32.xlu0 %v340, 64
    %v343 = vpop.permute.xlu0 %342
    %v345 = vmul.f32 %v328, %v343
    %347 = vrot.lane.b32.xlu0 %v345, 32
    %v348 = vpop.permute.xlu0 %347
    %v349 = vsel %vm153, %v348, 0
    %351 = vmatprep.subr.mxu0 0.0
    %352 = vmatpush1.msra.mxu0 %v36
    %353 = vmatprep.subr.mxu0 0.0
    %354 = vmatpush1.msra.mxu0 %v37
    %355 = vmatprep.subr.mxu0 0.0
    %356 = vmatpush1.msra.mxu0 %v38
    %357 = vmatprep.subr.mxu0 0.0
    %358 = vmatpush1.msra.mxu0 %v39
    %359 = vmatprep.subr.mxu0 0.0
    %360 = vmatpush1.msra.mxu0 0.0
    %361 = vmatprep.subr.mxu0 0.0
    %362 = vmatpush1.msra.mxu0 0.0
    %363 = vmatprep.subr.mxu0 0.0
    %364 = vmatpush1.msra.mxu0 0.0
    %365 = vmatprep.subr.mxu0 0.0
    %366 = vmatpush1.msra.mxu0 0.0
    %367 = vmatprep.subr.mxu0 0.0
    %368 = vmatpush1.msra.mxu0 0.0
    %369 = vmatprep.subr.mxu0 0.0
    %370 = vmatpush1.msra.mxu0 0.0
    %371 = vmatprep.subr.mxu0 0.0
    %372 = vmatpush1.msra.mxu0 0.0
    %373 = vmatprep.subr.mxu0 0.0
    %374 = vmatpush1.msra.mxu0 0.0
    %375 = vmatprep.subr.mxu0 0.0
    %376 = vmatpush1.msra.mxu0 0.0
    %377 = vmatprep.subr.mxu0 0.0
    %378 = vmatpush1.msra.mxu0 0.0
    %379 = vmatprep.subr.mxu0 0.0
    %380 = vmatpush1.msra.mxu0 0.0
    %381 = vmatprep.subr.mxu0 0.0
    %382 = vmatpush1.msra.mxu0 0.0
    %383 = vmatprep.subr.mxu0 0.0
    %384 = vmatpush1.msra.mxu0 0.0
    %385 = vmatprep.subr.mxu0 0.0
    %386 = vmatpush1.msra.mxu0 0.0
    %387 = vmatprep.subr.mxu0 0.0
    %388 = vmatpush1.msra.mxu0 0.0
    %389 = vmatprep.subr.mxu0 0.0
    %390 = vmatpush1.msra.mxu0 0.0
    %391 = vmatprep.subr.mxu0 0.0
    %392 = vmatpush1.msra.mxu0 0.0
    %393 = vmatprep.subr.mxu0 0.0
    %394 = vmatpush1.msra.mxu0 0.0
    %395 = vmatprep.subr.mxu0 0.0
    %396 = vmatpush1.msra.mxu0 0.0
    %397 = vmatprep.subr.mxu0 0.0
    %398 = vmatpush1.msra.mxu0 0.0
    %399 = vmatprep.subr.mxu0 0.0
    %400 = vmatpush1.msra.mxu0 0.0
    %401 = vmatprep.subr.mxu0 0.0
    %402 = vmatpush1.msra.mxu0 0.0
    %403 = vmatprep.subr.mxu0 0.0
    %404 = vmatpush1.msra.mxu0 0.0
    %405 = vmatprep.subr.mxu0 0.0
    %406 = vmatpush1.msra.mxu0 0.0
    %407 = vmatprep.subr.mxu0 0.0
    %408 = vmatpush1.msra.mxu0 0.0
    %409 = vmatprep.subr.mxu0 0.0
    %410 = vmatpush1.msra.mxu0 0.0
    %411 = vmatprep.subr.mxu0 0.0
    %412 = vmatpush1.msra.mxu0 0.0
    %413 = vmatprep.subr.mxu0 0.0
    %414 = vmatpush1.msra.mxu0 0.0
    %415 = vmatprep.mubr.f32.mxu0 0.0
    %416 = vmatmul.mubr.f32.gmra.mrb[0].mxu0 %v349
    %v417 = vpop.f32.mrb[0].mxu0
    %v418 = vadd.f32 0.0, %v417
    %v419 = vpop.f32.mrb[0].mxu0
    %420 = vdwg.mxu0
    %v421 = vadd.f32 %v74, %v418
    %v422 = vmul.f32 %v45, %v421
    %v423 = vtanh.pop %v422
    %v424 = vmul.f32 %v45, %v423
    %v425 = vadd.f32 %v424, %v46
    %v426 = vmul.f32 %v425, %v339
    %428 = vrot.lane.b32.xlu0 %v425, 64
    %v429 = vpop.permute.xlu0 %428
    %v431 = vmul.f32 %v425, %v429
    %433 = vrot.lane.b32.xlu0 %v431, 32
    %v434 = vpop.permute.xlu0 %433
    %v436 = vadd.f32 %v426, %v434
    %v437 = vtanh.pop %v436
    %439 = vrot.lane.b32.xlu0 %v437, 64
    %v440 = vpop.permute.xlu0 %439
    %v442 = vmul.f32 %v425, %v440
    %444 = vrot.lane.b32.xlu0 %v442, 32
    %v445 = vpop.permute.xlu0 %444
    %v446 = vsel %vm153, %v445, 0
    %448 = vmatprep.subr.mxu0 0.0
    %449 = vmatpush1.msra.mxu0 %v36
    %450 = vmatprep.subr.mxu0 0.0
    %451 = vmatpush1.msra.mxu0 %v37
    %452 = vmatprep.subr.mxu0 0.0
    %453 = vmatpush1.msra.mxu0 %v38
    %454 = vmatprep.subr.mxu0 0.0
    %455 = vmatpush1.msra.mxu0 %v39
    %456 = vmatprep.subr.mxu0 0.0
    %457 = vmatpush1.msra.mxu0 0.0
    %458 = vmatprep.subr.mxu0 0.0
    %459 = vmatpush1.msra.mxu0 0.0
    %460 = vmatprep.subr.mxu0 0.0
    %461 = vmatpush1.msra.mxu0 0.0
    %462 = vmatprep.subr.mxu0 0.0
    %463 = vmatpush1.msra.mxu0 0.0
    %464 = vmatprep.subr.mxu0 0.0
    %465 = vmatpush1.msra.mxu0 0.0
    %466 = vmatprep.subr.mxu0 0.0
    %467 = vmatpush1.msra.mxu0 0.0
    %468 = vmatprep.subr.mxu0 0.0
    %469 = vmatpush1.msra.mxu0 0.0
    %470 = vmatprep.subr.mxu0 0.0
    %471 = vmatpush1.msra.mxu0 0.0
    %472 = vmatprep.subr.mxu0 0.0
    %473 = vmatpush1.msra.mxu0 0.0
    %474 = vmatprep.subr.mxu0 0.0
    %475 = vmatpush1.msra.mxu0 0.0
    %476 = vmatprep.subr.mxu0 0.0
    %477 = vmatpush1.msra.mxu0 0.0
    %478 = vmatprep.subr.mxu0 0.0
    %479 = vmatpush1.msra.mxu0 0.0
    %480 = vmatprep.subr.mxu0 0.0
    %481 = vmatpush1.msra.mxu0 0.0
    %482 = vmatprep.subr.mxu0 0.0
    %483 = vmatpush1.msra.mxu0 0.0
    %484 = vmatprep.subr.mxu0 0.0
    %485 = vmatpush1.msra.mxu0 0.0
    %486 = vmatprep.subr.mxu0 0.0
    %487 = vmatpush1.msra.mxu0 0.0
    %488 = vmatprep.subr.mxu0 0.0
    %489 = vmatpush1.msra.mxu0 0.0
    %490 = vmatprep.subr.mxu0 0.0
    %491 = vmatpush1.msra.mxu0 0.0
    %492 = vmatprep.subr.mxu0 0.0
    %493 = vmatpush1.msra.mxu0 0.0
    %494 = vmatprep.subr.mxu0 0.0
    %495 = vmatpush1.msra.mxu0 0.0
    %496 = vmatprep.subr.mxu0 0.0
    %497 = vmatpush1.msra.mxu0 0.0
    %498 = vmatprep.subr.mxu0 0.0
    %499 = vmatpush1.msra.mxu0 0.0
    %500 = vmatprep.subr.mxu0 0.0
    %501 = vmatpush1.msra.mxu0 0.0
    %502 = vmatprep.subr.mxu0 0.0
    %503 = vmatpush1.msra.mxu0 0.0
    %504 = vmatprep.subr.mxu0 0.0
    %505 = vmatpush1.msra.mxu0 0.0
    %506 = vmatprep.subr.mxu0 0.0
    %507 = vmatpush1.msra.mxu0 0.0
    %508 = vmatprep.subr.mxu0 0.0
    %509 = vmatpush1.msra.mxu0 0.0
    %510 = vmatprep.subr.mxu0 0.0
    %511 = vmatpush1.msra.mxu0 0.0
    %512 = vmatprep.mubr.f32.mxu0 0.0
    %513 = vmatmul.mubr.f32.gmra.mrb[0].mxu0 %v446
    %v514 = vpop.f32.mrb[0].mxu0
    %v515 = vadd.f32 0.0, %v514
    %v516 = vpop.f32.mrb[0].mxu0
    %517 = vdwg.mxu0
    %v518 = vadd.f32 %v87, %v515
    %v519 = vmul.f32 %v45, %v518
    %v520 = vtanh.pop %v519
    %v521 = vmul.f32 %v45, %v520
    %v522 = vadd.f32 %v521, %v46
    %v523 = vmul.f32 %v522, %v436
    %525 = vrot.lane.b32.xlu0 %v522, 64
    %v526 = vpop.permute.xlu0 %525
    %v528 = vmul.f32 %v522, %v526
    %530 = vrot.lane.b32.xlu0 %v528, 32
    %v531 = vpop.permute.xlu0 %530
    %v533 = vadd.f32 %v523, %v531
    %v534 = vtanh.pop %v533
    %536 = vrot.lane.b32.xlu0 %v534, 64
    %v537 = vpop.permute.xlu0 %536
    %v539 = vmul.f32 %v522, %v537
    %541 = vrot.lane.b32.xlu0 %v539, 32
    %v542 = vpop.permute.xlu0 %541
    %v543 = vsel %vm153, %v542, 0
    %545 = vmatprep.subr.mxu0 0.0
    %546 = vmatpush1.msra.mxu0 %v36
    %547 = vmatprep.subr.mxu0 0.0
    %548 = vmatpush1.msra.mxu0 %v37
    %549 = vmatprep.subr.mxu0 0.0
    %550 = vmatpush1.msra.mxu0 %v38
    %551 = vmatprep.subr.mxu0 0.0
    %552 = vmatpush1.msra.mxu0 %v39
    %553 = vmatprep.subr.mxu0 0.0
    %554 = vmatpush1.msra.mxu0 0.0
    %555 = vmatprep.subr.mxu0 0.0
    %556 = vmatpush1.msra.mxu0 0.0
    %557 = vmatprep.subr.mxu0 0.0
    %558 = vmatpush1.msra.mxu0 0.0
    %559 = vmatprep.subr.mxu0 0.0
    %560 = vmatpush1.msra.mxu0 0.0
    %561 = vmatprep.subr.mxu0 0.0
    %562 = vmatpush1.msra.mxu0 0.0
    %563 = vmatprep.subr.mxu0 0.0
    %564 = vmatpush1.msra.mxu0 0.0
    %565 = vmatprep.subr.mxu0 0.0
    %566 = vmatpush1.msra.mxu0 0.0
    %567 = vmatprep.subr.mxu0 0.0
    %568 = vmatpush1.msra.mxu0 0.0
    %569 = vmatprep.subr.mxu0 0.0
    %570 = vmatpush1.msra.mxu0 0.0
    %571 = vmatprep.subr.mxu0 0.0
    %572 = vmatpush1.msra.mxu0 0.0
    %573 = vmatprep.subr.mxu0 0.0
    %574 = vmatpush1.msra.mxu0 0.0
    %575 = vmatprep.subr.mxu0 0.0
    %576 = vmatpush1.msra.mxu0 0.0
    %577 = vmatprep.subr.mxu0 0.0
    %578 = vmatpush1.msra.mxu0 0.0
    %579 = vmatprep.subr.mxu0 0.0
    %580 = vmatpush1.msra.mxu0 0.0
    %581 = vmatprep.subr.mxu0 0.0
    %582 = vmatpush1.msra.mxu0 0.0
    %583 = vmatprep.subr.mxu0 0.0
    %584 = vmatpush1.msra.mxu0 0.0
    %585 = vmatprep.subr.mxu0 0.0
    %586 = vmatpush1.msra.mxu0 0.0
    %587 = vmatprep.subr.mxu0 0.0
    %588 = vmatpush1.msra.mxu0 0.0
    %589 = vmatprep.subr.mxu0 0.0
    %590 = vmatpush1.msra.mxu0 0.0
    %591 = vmatprep.subr.mxu0 0.0
    %592 = vmatpush1.msra.mxu0 0.0
    %593 = vmatprep.subr.mxu0 0.0
    %594 = vmatpush1.msra.mxu0 0.0
    %595 = vmatprep.subr.mxu0 0.0
    %596 = vmatpush1.msra.mxu0 0.0
    %597 = vmatprep.subr.mxu0 0.0
    %598 = vmatpush1.msra.mxu0 0.0
    %599 = vmatprep.subr.mxu0 0.0
    %600 = vmatpush1.msra.mxu0 0.0
    %601 = vmatprep.subr.mxu0 0.0
    %602 = vmatpush1.msra.mxu0 0.0
    %603 = vmatprep.subr.mxu0 0.0
    %604 = vmatpush1.msra.mxu0 0.0
    %605 = vmatprep.subr.mxu0 0.0
    %606 = vmatpush1.msra.mxu0 0.0
    %607 = vmatprep.subr.mxu0 0.0
    %608 = vmatpush1.msra.mxu0 0.0
    %609 = vmatprep.mubr.f32.mxu0 0.0
    %610 = vmatmul.mubr.f32.gmra.mrb[0].mxu0 %v543
    %v611 = vpop.f32.mrb[0].mxu0
    %v612 = vadd.f32 0.0, %v611
    %v613 = vpop.f32.mrb[0].mxu0
    %614 = vdwg.mxu0
    %v615 = vadd.f32 %v100, %v612
    %v616 = vmul.f32 %v45, %v615
    %v617 = vtanh.pop %v616
    %v618 = vmul.f32 %v45, %v617
    %v619 = vadd.f32 %v618, %v46
    %v620 = vmul.f32 %v619, %v533
    %622 = vrot.lane.b32.xlu0 %v619, 64
    %v623 = vpop.permute.xlu0 %622
    %v625 = vmul.f32 %v619, %v623
    %627 = vrot.lane.b32.xlu0 %v625, 32
    %v628 = vpop.permute.xlu0 %627
    %v630 = vadd.f32 %v620, %v628
    %v631 = vtanh.pop %v630
    %633 = vrot.lane.b32.xlu0 %v631, 64
    %v634 = vpop.permute.xlu0 %633
    %v636 = vmul.f32 %v619, %v634
    %638 = vrot.lane.b32.xlu0 %v636, 32
    %v639 = vpop.permute.xlu0 %638
    %v640 = vsel %vm153, %v639, 0
    %642 = vmatprep.subr.mxu0 0.0
    %643 = vmatpush1.msra.mxu0 %v36
    %644 = vmatprep.subr.mxu0 0.0
    %645 = vmatpush1.msra.mxu0 %v37
    %646 = vmatprep.subr.mxu0 0.0
    %647 = vmatpush1.msra.mxu0 %v38
    %648 = vmatprep.subr.mxu0 0.0
    %649 = vmatpush1.msra.mxu0 %v39
    %650 = vmatprep.subr.mxu0 0.0
    %651 = vmatpush1.msra.mxu0 0.0
    %652 = vmatprep.subr.mxu0 0.0
    %653 = vmatpush1.msra.mxu0 0.0
    %654 = vmatprep.subr.mxu0 0.0
    %655 = vmatpush1.msra.mxu0 0.0
    %656 = vmatprep.subr.mxu0 0.0
    %657 = vmatpush1.msra.mxu0 0.0
    %658 = vmatprep.subr.mxu0 0.0
    %659 = vmatpush1.msra.mxu0 0.0
    %660 = vmatprep.subr.mxu0 0.0
    %661 = vmatpush1.msra.mxu0 0.0
    %662 = vmatprep.subr.mxu0 0.0
    %663 = vmatpush1.msra.mxu0 0.0
    %664 = vmatprep.subr.mxu0 0.0
    %665 = vmatpush1.msra.mxu0 0.0
    %666 = vmatprep.subr.mxu0 0.0
    %667 = vmatpush1.msra.mxu0 0.0
    %668 = vmatprep.subr.mxu0 0.0
    %669 = vmatpush1.msra.mxu0 0.0
    %670 = vmatprep.subr.mxu0 0.0
    %671 = vmatpush1.msra.mxu0 0.0
    %672 = vmatprep.subr.mxu0 0.0
    %673 = vmatpush1.msra.mxu0 0.0
    %674 = vmatprep.subr.mxu0 0.0
    %675 = vmatpush1.msra.mxu0 0.0
    %676 = vmatprep.subr.mxu0 0.0
    %677 = vmatpush1.msra.mxu0 0.0
    %678 = vmatprep.subr.mxu0 0.0
    %679 = vmatpush1.msra.mxu0 0.0
    %680 = vmatprep.subr.mxu0 0.0
    %681 = vmatpush1.msra.mxu0 0.0
    %682 = vmatprep.subr.mxu0 0.0
    %683 = vmatpush1.msra.mxu0 0.0
    %684 = vmatprep.subr.mxu0 0.0
    %685 = vmatpush1.msra.mxu0 0.0
    %686 = vmatprep.subr.mxu0 0.0
    %687 = vmatpush1.msra.mxu0 0.0
    %688 = vmatprep.subr.mxu0 0.0
    %689 = vmatpush1.msra.mxu0 0.0
    %690 = vmatprep.subr.mxu0 0.0
    %691 = vmatpush1.msra.mxu0 0.0
    %692 = vmatprep.subr.mxu0 0.0
    %693 = vmatpush1.msra.mxu0 0.0
    %694 = vmatprep.subr.mxu0 0.0
    %695 = vmatpush1.msra.mxu0 0.0
    %696 = vmatprep.subr.mxu0 0.0
    %697 = vmatpush1.msra.mxu0 0.0
    %698 = vmatprep.subr.mxu0 0.0
    %699 = vmatpush1.msra.mxu0 0.0
    %700 = vmatprep.subr.mxu0 0.0
    %701 = vmatpush1.msra.mxu0 0.0
    %702 = vmatprep.subr.mxu0 0.0
    %703 = vmatpush1.msra.mxu0 0.0
    %704 = vmatprep.subr.mxu0 0.0
    %705 = vmatpush1.msra.mxu0 0.0
    %706 = vmatprep.mubr.f32.mxu0 0.0
    %707 = vmatmul.mubr.f32.gmra.mrb[0].mxu0 %v640
    %v708 = vpop.f32.mrb[0].mxu0
    %v709 = vadd.f32 0.0, %v708
    %v710 = vpop.f32.mrb[0].mxu0
    %711 = vdwg.mxu0
    %v712 = vadd.f32 %v113, %v709
    %v713 = vmul.f32 %v45, %v712
    %v714 = vtanh.pop %v713
    %v715 = vmul.f32 %v45, %v714
    %v716 = vadd.f32 %v715, %v46
    %v717 = vmul.f32 %v716, %v630
    %719 = vrot.lane.b32.xlu0 %v716, 64
    %v720 = vpop.permute.xlu0 %719
    %v722 = vmul.f32 %v716, %v720
    %724 = vrot.lane.b32.xlu0 %v722, 32
    %v725 = vpop.permute.xlu0 %724
    %v727 = vadd.f32 %v717, %v725
    %v728 = vtanh.pop %v727
    %730 = vrot.lane.b32.xlu0 %v728, 64
    %v731 = vpop.permute.xlu0 %730
    %v733 = vmul.f32 %v716, %v731
    %735 = vrot.lane.b32.xlu0 %v733, 32
    %v736 = vpop.permute.xlu0 %735
    %v737 = vsel %vm153, %v736, 0
    %739 = vmatprep.subr.mxu0 0.0
    %740 = vmatpush1.msra.mxu0 %v36
    %741 = vmatprep.subr.mxu0 0.0
    %742 = vmatpush1.msra.mxu0 %v37
    %743 = vmatprep.subr.mxu0 0.0
    %744 = vmatpush1.msra.mxu0 %v38
    %745 = vmatprep.subr.mxu0 0.0
    %746 = vmatpush1.msra.mxu0 %v39
    %747 = vmatprep.subr.mxu0 0.0
    %748 = vmatpush1.msra.mxu0 0.0
    %749 = vmatprep.subr.mxu0 0.0
    %750 = vmatpush1.msra.mxu0 0.0
    %751 = vmatprep.subr.mxu0 0.0
    %752 = vmatpush1.msra.mxu0 0.0
    %753 = vmatprep.subr.mxu0 0.0
    %754 = vmatpush1.msra.mxu0 0.0
    %755 = vmatprep.subr.mxu0 0.0
    %756 = vmatpush1.msra.mxu0 0.0
    %757 = vmatprep.subr.mxu0 0.0
    %758 = vmatpush1.msra.mxu0 0.0
    %759 = vmatprep.subr.mxu0 0.0
    %760 = vmatpush1.msra.mxu0 0.0
    %761 = vmatprep.subr.mxu0 0.0
    %762 = vmatpush1.msra.mxu0 0.0
    %763 = vmatprep.subr.mxu0 0.0
    %764 = vmatpush1.msra.mxu0 0.0
    %765 = vmatprep.subr.mxu0 0.0
    %766 = vmatpush1.msra.mxu0 0.0
    %767 = vmatprep.subr.mxu0 0.0
    %768 = vmatpush1.msra.mxu0 0.0
    %769 = vmatprep.subr.mxu0 0.0
    %770 = vmatpush1.msra.mxu0 0.0
    %771 = vmatprep.subr.mxu0 0.0
    %772 = vmatpush1.msra.mxu0 0.0
    %773 = vmatprep.subr.mxu0 0.0
    %774 = vmatpush1.msra.mxu0 0.0
    %775 = vmatprep.subr.mxu0 0.0
    %776 = vmatpush1.msra.mxu0 0.0
    %777 = vmatprep.subr.mxu0 0.0
    %778 = vmatpush1.msra.mxu0 0.0
    %779 = vmatprep.subr.mxu0 0.0
    %780 = vmatpush1.msra.mxu0 0.0
    %781 = vmatprep.subr.mxu0 0.0
    %782 = vmatpush1.msra.mxu0 0.0
    %783 = vmatprep.subr.mxu0 0.0
    %784 = vmatpush1.msra.mxu0 0.0
    %785 = vmatprep.subr.mxu0 0.0
    %786 = vmatpush1.msra.mxu0 0.0
    %787 = vmatprep.subr.mxu0 0.0
    %788 = vmatpush1.msra.mxu0 0.0
    %789 = vmatprep.subr.mxu0 0.0
    %790 = vmatpush1.msra.mxu0 0.0
    %791 = vmatprep.subr.mxu0 0.0
    %792 = vmatpush1.msra.mxu0 0.0
    %793 = vmatprep.subr.mxu0 0.0
    %794 = vmatpush1.msra.mxu0 0.0
    %795 = vmatprep.subr.mxu0 0.0
    %796 = vmatpush1.msra.mxu0 0.0
    %797 = vmatprep.subr.mxu0 0.0
    %798 = vmatpush1.msra.mxu0 0.0
    %799 = vmatprep.subr.mxu0 0.0
    %800 = vmatpush1.msra.mxu0 0.0
    %801 = vmatprep.subr.mxu0 0.0
    %802 = vmatpush1.msra.mxu0 0.0
    %803 = vmatprep.mubr.f32.mxu0 0.0
    %804 = vmatmul.mubr.f32.gmra.mrb[0].mxu0 %v737
    %v805 = vpop.f32.mrb[0].mxu0
    %v806 = vadd.f32 0.0, %v805
    %v807 = vpop.f32.mrb[0].mxu0
    %808 = vdwg.mxu0
    %v809 = vadd.f32 %v126, %v806
    %v810 = vmul.f32 %v45, %v809
    %v811 = vtanh.pop %v810
    %v812 = vmul.f32 %v45, %v811
    %v813 = vadd.f32 %v812, %v46
    %v814 = vmul.f32 %v813, %v727
    %816 = vrot.lane.b32.xlu0 %v813, 64
    %v817 = vpop.permute.xlu0 %816
    %v819 = vmul.f32 %v813, %v817
    %821 = vrot.lane.b32.xlu0 %v819, 32
    %v822 = vpop.permute.xlu0 %821
    %v824 = vadd.f32 %v814, %v822
    %v825 = vtanh.pop %v824
    %827 = vrot.lane.b32.xlu0 %v825, 64
    %v828 = vpop.permute.xlu0 %827
    %v830 = vmul.f32 %v813, %v828
    %832 = vrot.lane.b32.xlu0 %v830, 32
    %v833 = vpop.permute.xlu0 %832
    %v834 = vsel %vm153, %v833, 0
    %836 = vmatprep.subr.mxu0 0.0
    %837 = vmatpush1.msra.mxu0 %v36
    %838 = vmatprep.subr.mxu0 0.0
    %839 = vmatpush1.msra.mxu0 %v37
    %840 = vmatprep.subr.mxu0 0.0
    %841 = vmatpush1.msra.mxu0 %v38
    %842 = vmatprep.subr.mxu0 0.0
    %843 = vmatpush1.msra.mxu0 %v39
    %844 = vmatprep.subr.mxu0 0.0
    %845 = vmatpush1.msra.mxu0 0.0
    %846 = vmatprep.subr.mxu0 0.0
    %847 = vmatpush1.msra.mxu0 0.0
    %848 = vmatprep.subr.mxu0 0.0
    %849 = vmatpush1.msra.mxu0 0.0
    %850 = vmatprep.subr.mxu0 0.0
    %851 = vmatpush1.msra.mxu0 0.0
    %852 = vmatprep.subr.mxu0 0.0
    %853 = vmatpush1.msra.mxu0 0.0
    %854 = vmatprep.subr.mxu0 0.0
    %855 = vmatpush1.msra.mxu0 0.0
    %856 = vmatprep.subr.mxu0 0.0
    %857 = vmatpush1.msra.mxu0 0.0
    %858 = vmatprep.subr.mxu0 0.0
    %859 = vmatpush1.msra.mxu0 0.0
    %860 = vmatprep.subr.mxu0 0.0
    %861 = vmatpush1.msra.mxu0 0.0
    %862 = vmatprep.subr.mxu0 0.0
    %863 = vmatpush1.msra.mxu0 0.0
    %864 = vmatprep.subr.mxu0 0.0
    %865 = vmatpush1.msra.mxu0 0.0
    %866 = vmatprep.subr.mxu0 0.0
    %867 = vmatpush1.msra.mxu0 0.0
    %868 = vmatprep.subr.mxu0 0.0
    %869 = vmatpush1.msra.mxu0 0.0
    %870 = vmatprep.subr.mxu0 0.0
    %871 = vmatpush1.msra.mxu0 0.0
    %872 = vmatprep.subr.mxu0 0.0
    %873 = vmatpush1.msra.mxu0 0.0
    %874 = vmatprep.subr.mxu0 0.0
    %875 = vmatpush1.msra.mxu0 0.0
    %876 = vmatprep.subr.mxu0 0.0
    %877 = vmatpush1.msra.mxu0 0.0
    %878 = vmatprep.subr.mxu0 0.0
    %879 = vmatpush1.msra.mxu0 0.0
    %880 = vmatprep.subr.mxu0 0.0
    %881 = vmatpush1.msra.mxu0 0.0
    %882 = vmatprep.subr.mxu0 0.0
    %883 = vmatpush1.msra.mxu0 0.0
    %884 = vmatprep.subr.mxu0 0.0
    %885 = vmatpush1.msra.mxu0 0.0
    %886 = vmatprep.subr.mxu0 0.0
    %887 = vmatpush1.msra.mxu0 0.0
    %888 = vmatprep.subr.mxu0 0.0
    %889 = vmatpush1.msra.mxu0 0.0
    %890 = vmatprep.subr.mxu0 0.0
    %891 = vmatpush1.msra.mxu0 0.0
    %892 = vmatprep.subr.mxu0 0.0
    %893 = vmatpush1.msra.mxu0 0.0
    %894 = vmatprep.subr.mxu0 0.0
    %895 = vmatpush1.msra.mxu0 0.0
    %896 = vmatprep.subr.mxu0 0.0
    %897 = vmatpush1.msra.mxu0 0.0
    %898 = vmatprep.subr.mxu0 0.0
    %899 = vmatpush1.msra.mxu0 0.0
    %900 = vmatprep.mubr.f32.mxu0 0.0
    %901 = vmatmul.mubr.f32.gmra.mrb[0].mxu0 %v834
    %v902 = vpop.f32.mrb[0].mxu0
    %v903 = vadd.f32 0.0, %v902
    %v904 = vpop.f32.mrb[0].mxu0
    %905 = vdwg.mxu0
    %v906 = vadd.f32 %v139, %v903
    %v907 = vmul.f32 %v45, %v906
    %v908 = vtanh.pop %v907
    %v909 = vmul.f32 %v45, %v908
    %v910 = vadd.f32 %v909, %v46
    %v911 = vmul.f32 %v910, %v824
    %913 = vrot.lane.b32.xlu0 %v910, 64
    %v914 = vpop.permute.xlu0 %913
    %v916 = vmul.f32 %v910, %v914
    %918 = vrot.lane.b32.xlu0 %v916, 32
    %v919 = vpop.permute.xlu0 %918
    %v921 = vadd.f32 %v911, %v919
    %v922 = vtanh.pop %v921
    %924 = vrot.lane.b32.xlu0 %v922, 64
    %v925 = vpop.permute.xlu0 %924
    %v927 = vmul.f32 %v910, %v925
    %929 = vrot.lane.b32.xlu0 %v927, 32
    %v930 = vpop.permute.xlu0 %929
    %v931 = vsel %vm153, %v930, 0
    %933 = vmatprep.subr.mxu0 0.0
    %934 = vmatpush1.msra.mxu0 %v36
    %935 = vmatprep.subr.mxu0 0.0
    %936 = vmatpush1.msra.mxu0 %v37
    %937 = vmatprep.subr.mxu0 0.0
    %938 = vmatpush1.msra.mxu0 %v38
    %939 = vmatprep.subr.mxu0 0.0
    %940 = vmatpush1.msra.mxu0 %v39
    %941 = vmatprep.subr.mxu0 0.0
    %942 = vmatpush1.msra.mxu0 0.0
    %943 = vmatprep.subr.mxu0 0.0
    %944 = vmatpush1.msra.mxu0 0.0
    %945 = vmatprep.subr.mxu0 0.0
    %946 = vmatpush1.msra.mxu0 0.0
    %947 = vmatprep.subr.mxu0 0.0
    %948 = vmatpush1.msra.mxu0 0.0
    %949 = vmatprep.subr.mxu0 0.0
    %950 = vmatpush1.msra.mxu0 0.0
    %951 = vmatprep.subr.mxu0 0.0
    %952 = vmatpush1.msra.mxu0 0.0
    %953 = vmatprep.subr.mxu0 0.0
    %954 = vmatpush1.msra.mxu0 0.0
    %955 = vmatprep.subr.mxu0 0.0
    %956 = vmatpush1.msra.mxu0 0.0
    %957 = vmatprep.subr.mxu0 0.0
    %958 = vmatpush1.msra.mxu0 0.0
    %959 = vmatprep.subr.mxu0 0.0
    %960 = vmatpush1.msra.mxu0 0.0
    %961 = vmatprep.subr.mxu0 0.0
    %962 = vmatpush1.msra.mxu0 0.0
    %963 = vmatprep.subr.mxu0 0.0
    %964 = vmatpush1.msra.mxu0 0.0
    %965 = vmatprep.subr.mxu0 0.0
    %966 = vmatpush1.msra.mxu0 0.0
    %967 = vmatprep.subr.mxu0 0.0
    %968 = vmatpush1.msra.mxu0 0.0
    %969 = vmatprep.subr.mxu0 0.0
    %970 = vmatpush1.msra.mxu0 0.0
    %971 = vmatprep.subr.mxu0 0.0
    %972 = vmatpush1.msra.mxu0 0.0
    %973 = vmatprep.subr.mxu0 0.0
    %974 = vmatpush1.msra.mxu0 0.0
    %975 = vmatprep.subr.mxu0 0.0
    %976 = vmatpush1.msra.mxu0 0.0
    %977 = vmatprep.subr.mxu0 0.0
    %978 = vmatpush1.msra.mxu0 0.0
    %979 = vmatprep.subr.mxu0 0.0
    %980 = vmatpush1.msra.mxu0 0.0
    %981 = vmatprep.subr.mxu0 0.0
    %982 = vmatpush1.msra.mxu0 0.0
    %983 = vmatprep.subr.mxu0 0.0
    %984 = vmatpush1.msra.mxu0 0.0
    %985 = vmatprep.subr.mxu0 0.0
    %986 = vmatpush1.msra.mxu0 0.0
    %987 = vmatprep.subr.mxu0 0.0
    %988 = vmatpush1.msra.mxu0 0.0
    %989 = vmatprep.subr.mxu0 0.0
    %990 = vmatpush1.msra.mxu0 0.0
    %991 = vmatprep.subr.mxu0 0.0
    %992 = vmatpush1.msra.mxu0 0.0
    %993 = vmatprep.subr.mxu0 0.0
    %994 = vmatpush1.msra.mxu0 0.0
    %995 = vmatprep.subr.mxu0 0.0
    %996 = vmatpush1.msra.mxu0 0.0
    %997 = vmatprep.mubr.f32.mxu0 0.0
    %998 = vmatmul.mubr.f32.gmra.mrb[0].mxu0 %v931
    %v999 = vpop.f32.mrb[0].mxu0
    %v1000 = vadd.f32 0.0, %v999
    %v1001 = vpop.f32.mrb[0].mxu0
    %1002 = vdwg.mxu0
    %v1003 = vadd.f32 %v152, %v1000
    %v1004 = vmul.f32 %v45, %v1003
    %v1005 = vtanh.pop %v1004
    %v1006 = vmul.f32 %v45, %v1005
    %v1007 = vadd.f32 %v1006, %v46
    %v1008 = vmul.f32 %v1007, %v921
    %1010 = vrot.lane.b32.xlu0 %v1007, 64
    %v1011 = vpop.permute.xlu0 %1010
    %v1013 = vmul.f32 %v1007, %v1011
    %1015 = vrot.lane.b32.xlu0 %v1013, 32
    %v1016 = vpop.permute.xlu0 %1015
    %v1018 = vadd.f32 %v1008, %v1016
    %v1019 = vtanh.pop %v1018
    %1021 = vrot.lane.b32.xlu0 %v1019, 64
    %v1022 = vpop.permute.xlu0 %1021
    %v1024 = vmul.f32 %v1007, %v1022
    %v1025 = vrot.slane %v345, 6
    %v1027 = vrot.slane %v442, 4
    %v1029 = vrot.slane %v539, 2
    %v1031 = vrot.slane %v733, 6
    %v1033 = vrot.slane %v830, 4
    %v1035 = vrot.slane %v927, 2
    %vm1037 = vcmask 1041408
    %v1038 = vsel %vm1037, %v248, %v1025
    %vm1039 = vcmask 1043456
    %v1040 = vsel %vm1039, %v1038, %v1027
    %vm1041 = vcmask 1045504
    %v1042 = vsel %vm1041, %v1040, %v1029
    %v1043 = vsel %vm1037, %v636, %v1031
    %v1044 = vsel %vm1039, %v1043, %v1033
    %v1045 = vsel %vm1041, %v1044, %v1035
    %v1046 = vld [vmem:[%s4] sm:$0xff]
    %v1047 = vld [vmem:[%s4 + $0x8] sm:$0xff]
    %v1048 = vld [vmem:[%s4 + $0x10] sm:$0xff]
    %v1049 = vld [vmem:[%s4 + $0x18] sm:$0xff]
    %v1050 = vld [vmem:[%s5] sm:$0x1]
    %v1052 = vlaneseq
    %v1053 = vshrl.u32 %v1052, 7
    %v1054 = vsub.s32 0, %v1053
    %v1055 = vrot.slane %v1050, %v1054
    %1060 = vrot.lane.b32.xlu0 %v1042, 32
    %v1061 = vpop.permute.xlu0 %1060
    %1062 = vrot.lane.b32.xlu0 %v1045, 32
    %v1063 = vpop.permute.xlu0 %1062
    %1064 = vrot.lane.b32.xlu0 %v1024, 32
    %v1065 = vpop.permute.xlu0 %1064
    %v1066 = vsel %vm153, %v1061, 0
    %v1068 = vsel %vm153, %v1063, 0
    %v1070 = vsel %vm153, %v1065, 0
    %1072 = vmatprep.subr.mxu0 0.0
    %1073 = vmatpush1.msra.mxu0 %v1046
    %1074 = vmatprep.subr.mxu0 0.0
    %1075 = vmatpush1.msra.mxu0 %v1047
    %1076 = vmatprep.subr.mxu0 0.0
    %1077 = vmatpush1.msra.mxu0 %v1048
    %1078 = vmatprep.subr.mxu0 0.0
    %1079 = vmatpush1.msra.mxu0 %v1049
    %1080 = vmatprep.subr.mxu0 0.0
    %1081 = vmatpush1.msra.mxu0 0.0
    %1082 = vmatprep.subr.mxu0 0.0
    %1083 = vmatpush1.msra.mxu0 0.0
    %1084 = vmatprep.subr.mxu0 0.0
    %1085 = vmatpush1.msra.mxu0 0.0
    %1086 = vmatprep.subr.mxu0 0.0
    %1087 = vmatpush1.msra.mxu0 0.0
    %1088 = vmatprep.subr.mxu0 0.0
    %1089 = vmatpush1.msra.mxu0 0.0
    %1090 = vmatprep.subr.mxu0 0.0
    %1091 = vmatpush1.msra.mxu0 0.0
    %1092 = vmatprep.subr.mxu0 0.0
    %1093 = vmatpush1.msra.mxu0 0.0
    %1094 = vmatprep.subr.mxu0 0.0
    %1095 = vmatpush1.msra.mxu0 0.0
    %1096 = vmatprep.subr.mxu0 0.0
    %1097 = vmatpush1.msra.mxu0 0.0
    %1098 = vmatprep.subr.mxu0 0.0
    %1099 = vmatpush1.msra.mxu0 0.0
    %1100 = vmatprep.subr.mxu0 0.0
    %1101 = vmatpush1.msra.mxu0 0.0
    %1102 = vmatprep.subr.mxu0 0.0
    %1103 = vmatpush1.msra.mxu0 0.0
    %1104 = vmatprep.subr.mxu0 0.0
    %1105 = vmatpush1.msra.mxu0 0.0
    %1106 = vmatprep.subr.mxu0 0.0
    %1107 = vmatpush1.msra.mxu0 0.0
    %1108 = vmatprep.subr.mxu0 0.0
    %1109 = vmatpush1.msra.mxu0 0.0
    %1110 = vmatprep.subr.mxu0 0.0
    %1111 = vmatpush1.msra.mxu0 0.0
    %1112 = vmatprep.subr.mxu0 0.0
    %1113 = vmatpush1.msra.mxu0 0.0
    %1114 = vmatprep.subr.mxu0 0.0
    %1115 = vmatpush1.msra.mxu0 0.0
    %1116 = vmatprep.subr.mxu0 0.0
    %1117 = vmatpush1.msra.mxu0 0.0
    %1118 = vmatprep.subr.mxu0 0.0
    %1119 = vmatpush1.msra.mxu0 0.0
    %1120 = vmatprep.subr.mxu0 0.0
    %1121 = vmatpush1.msra.mxu0 0.0
    %1122 = vmatprep.subr.mxu0 0.0
    %1123 = vmatpush1.msra.mxu0 0.0
    %1124 = vmatprep.subr.mxu0 0.0
    %1125 = vmatpush1.msra.mxu0 0.0
    %1126 = vmatprep.subr.mxu0 0.0
    %1127 = vmatpush1.msra.mxu0 0.0
    %1128 = vmatprep.subr.mxu0 0.0
    %1129 = vmatpush1.msra.mxu0 0.0
    %1130 = vmatprep.subr.mxu0 0.0
    %1131 = vmatpush1.msra.mxu0 0.0
    %1132 = vmatprep.subr.mxu0 0.0
    %1133 = vmatpush1.msra.mxu0 0.0
    %1134 = vmatprep.subr.mxu0 0.0
    %1135 = vmatpush1.msra.mxu0 0.0
    %1136 = vmatprep.mubr.f32.mxu0 0.0
    %1137 = vmatmul.mubr.f32.gmra.mrb[0].mxu0 %v1066
    %v1138 = vpop.f32.mrb[0].mxu0
    %v1139 = vadd.f32 %v1055, %v1138
    %v1140 = vpop.f32.mrb[0].mxu0
    %1141 = vmatprep.mubr.f32.mxu0 0.0
    %1142 = vmatmul.mubr.f32.gmra.mrb[0].mxu0 %v1068
    %v1143 = vpop.f32.mrb[0].mxu0
    %v1144 = vadd.f32 %v1055, %v1143
    %v1145 = vpop.f32.mrb[0].mxu0
    %1146 = vmatprep.mubr.f32.mxu0 0.0
    %1147 = vmatmul.mubr.f32.gmra.mrb[0].mxu0 %v1070
    %v1148 = vpop.f32.mrb[0].mxu0
    %v1149 = vadd.f32 %v1055, %v1148
    %v1150 = vpop.f32.mrb[0].mxu0
    %1151 = vdwg.mxu0
    %1152 = vst [vmem:[%s6] sm:$0xff] %v1139
    %1153 = vst [vmem:[%s6 + $0x8] sm:$0xff] %v1144
    %1154 = vst [vmem:[%s6 + $0x10] sm:$0x3] %v1149
    // Predicated region
    $region30: #{caption_model_forward.1} parent=1 // pred_check
      _
    $region31: #{caption_model_forward.1} parent=1 // pred_check_branch
      %1156 = sbr.rel (0) target = $region33
    $region32: #{caption_model_forward.1} parent=1 // pred_region
      _
    $region33: #{caption_model_forward.1} parent=1 // pred_fallthru
      _
    // Predicated region
    $region34: #{caption_model_forward.1} parent=1 // pred_check
      _
    $region35: #{caption_model_forward.1} parent=1 // pred_check_branch
      %1158 = sbr.rel (0) target = $region37
    $region36: #{caption_model_forward.1} parent=1 // pred_region
      _
    $region37: #{caption_model_forward.1} parent=1 // pred_fallthru
      _
    %1159 = vsyncpa [#allocation3], 1

</llo_original>
